<compile_context>
chip_gen: v5e
topology: v5e:2x2
jax: 0.10.0
libtpu: 0.0.40
codegen_flags: <defaults>
</compile_context>

<pallas_src>
import functools

import jax
import jax.numpy as jnp
from jax.experimental import pallas as pl
from jax.experimental.pallas import tpu as pltpu


# ---------------------------------------------------------------------------
# Kernel
# ---------------------------------------------------------------------------
def _mlp_policy_kernel(x_ref,
                       w1_ref, b1_ref,
                       w2_ref, b2_ref,
                       w3_ref, b3_ref,
                       w4_ref, b4_ref,
                       o_ref):
    """Fused 4-layer MLP: bf16 MXU matmuls, f32 accumulation + bias + ReLU."""
    x = x_ref[...].astype(jnp.bfloat16)

    h = jnp.dot(x, w1_ref[...], preferred_element_type=jnp.float32) + b1_ref[...]
    h = jnp.maximum(h, 0.0)

    h = jnp.dot(h.astype(jnp.bfloat16), w2_ref[...],
                preferred_element_type=jnp.float32) + b2_ref[...]
    h = jnp.maximum(h, 0.0)

    h = jnp.dot(h.astype(jnp.bfloat16), w3_ref[...],
                preferred_element_type=jnp.float32) + b3_ref[...]
    h = jnp.maximum(h, 0.0)

    out = jnp.dot(h.astype(jnp.bfloat16), w4_ref[...],
                  preferred_element_type=jnp.float32) + b4_ref[...]
    o_ref[...] = out.astype(o_ref.dtype)


# ---------------------------------------------------------------------------
# Helpers
# ---------------------------------------------------------------------------
def _round_up(x, m):
    return ((x + m - 1) // m) * m


def _pad_axis(a, target, axis):
    pad = target - a.shape[axis]
    if pad <= 0:
        return a
    widths = [(0, 0)] * a.ndim
    widths[axis] = (0, pad)
    return jnp.pad(a, widths)


def prepare_params(params):
    """One-time (init / param-load) padding + casting of the weights.

    * hidden / action feature dims are zero-padded to multiples of 128 so
      every matmul, bias add, ReLU and the output store are full-lane,
    * weights are cast to bf16 for the MXU (biases stay f32).

    Call this ONCE, not per forward step: hoisting it out of the hot path
    removes a full HBM read+write over every weight tensor per call.
    Padding is exact: padded hidden units get zero weights + zero bias ->
    ReLU(0) = 0 -> contribute nothing; padded action columns are sliced off.
    """
    hidden = params["w1"].shape[1]
    action = params["w4"].shape[1]
    h_pad = _round_up(hidden, 128)
    a_pad = _round_up(action, 128)

    w1 = _pad_axis(params["w1"], h_pad, 1).astype(jnp.bfloat16)
    b1 = _pad_axis(params["b1"], h_pad, 1).astype(jnp.float32)
    w2 = _pad_axis(_pad_axis(params["w2"], h_pad, 0), h_pad, 1).astype(jnp.bfloat16)
    b2 = _pad_axis(params["b2"], h_pad, 1).astype(jnp.float32)
    w3 = _pad_axis(_pad_axis(params["w3"], h_pad, 0), h_pad, 1).astype(jnp.bfloat16)
    b3 = _pad_axis(params["b3"], h_pad, 1).astype(jnp.float32)
    w4 = _pad_axis(_pad_axis(params["w4"], h_pad, 0), a_pad, 1).astype(jnp.bfloat16)
    b4 = _pad_axis(params["b4"], a_pad, 1).astype(jnp.float32)
    return (w1, b1, w2, b2, w3, b3, w4, b4)


def _choose_batch_tile(B, block_b):
    """Pick an MXU / vreg friendly batch tile.

    * multiple of 16 (bf16 packs 16 rows per vreg); snapped down to a
      multiple of 256 (v6e/v7x MXU) or 128 (v5e) when large enough,
    * capped so the grid has >= 2 blocks whenever the batch allows it
      (dimension_semantics=('parallel',) only uses both v7x TensorCores if
      there are >= 2 blocks).
    """
    B_pad = _round_up(B, 16)
    bb = min(block_b, B_pad)
    if B_pad >= 32:                                   # room for two tiles
        bb = min(bb, _round_up(pl.cdiv(B_pad, 2), 16))
    for align in (256, 128, 16):                      # snap to native tile
        if bb >= align:
            bb = (bb // align) * align
            break
    return max(16, bb)


# ---------------------------------------------------------------------------
# Forward
# ---------------------------------------------------------------------------
@functools.partial(
    jax.jit,
    static_argnames=("action_size", "block_b", "single_buffer_weights"))
def _forward_impl(observations, padded_params, *, action_size, block_b,
                  single_buffer_weights):
    B, obs_size = observations.shape
    consts = padded_params
    w1, b1, w2, b2, w3, b3, w4, b4 = consts
    h_pad = w1.shape[1]
    a_pad = w4.shape[1]

    bb = _choose_batch_tile(B, block_b)
    grid = (pl.cdiv(B, bb),)

    # Constant index_map -> Pallas keeps weights/biases VMEM-resident across
    # batch tiles (no re-DMA).  Single-buffering halves their VMEM footprint
    # (matters most on v7x's 64 MiB VMEM once hidden_size grows).
    if single_buffer_weights:
        def const_spec(arr):
            return pl.BlockSpec(arr.shape, lambda i: (0, 0),
                                pipeline_mode=pl.Buffered(1))
    else:
        def const_spec(arr):
            return pl.BlockSpec(arr.shape, lambda i: (0, 0))

    in_specs = [pl.BlockSpec((bb, obs_size), lambda i: (i, 0))]
    in_specs += [const_spec(c) for c in consts]
    out_spec = pl.BlockSpec((bb, a_pad), lambda i: (i, 0))   # lane-dense store

    # Explicit VMEM budget: the default scoped limits (16 MiB v5e, 32 MiB
    # v6e/v7x) are far below physical; size the cap from the real footprint
    # so large batch tiles + resident weights are neither rejected nor shrunk.
    w_bytes = sum(int(c.size) * c.dtype.itemsize for c in consts)
    wbuf = 1 if single_buffer_weights else 2
    footprint = (2 * bb * obs_size * 4        # double-buffered x tiles (f32)
                 + wbuf * w_bytes             # resident weights + biases
                 + 2 * bb * a_pad * 4         # double-buffered out tiles (f32)
                 + 4 * bb * h_pad * 4)        # live activation temporaries
    vmem_limit_bytes = int(min(64 * 2 ** 20, max(2 * footprint, 32 * 2 ** 20)))

    flops = 2 * B * (obs_size * h_pad + 2 * h_pad * h_pad + h_pad * a_pad)
    bytes_accessed = (int(observations.size) * observations.dtype.itemsize
                      + B * a_pad * 4 + w_bytes)

    out_padded = pl.pallas_call(
        _mlp_policy_kernel,
        out_shape=jax.ShapeDtypeStruct((B, a_pad), jnp.float32),
        grid_spec=pltpu.PrefetchScalarGridSpec(
            num_scalar_prefetch=0,
            grid=grid,
            in_specs=in_specs,
            out_specs=out_spec,
        ),
        compiler_params=pltpu.CompilerParams(
            dimension_semantics=("parallel",),
            vmem_limit_bytes=vmem_limit_bytes),
        cost_estimate=pl.CostEstimate(
            flops=flops, transcendentals=0, bytes_accessed=bytes_accessed),
    )(observations, *consts)

    return out_padded[:, :action_size]


_SINGLE_BUFFER_OK = True


def mlp_policy_forward(observations, padded_params, *, action_size,
                       block_b=512):
    """MLPPolicy.forward.  `padded_params` must come from prepare_params()."""
    global _SINGLE_BUFFER_OK
    if _SINGLE_BUFFER_OK:
        try:
            return _forward_impl(observations, padded_params,
                                 action_size=action_size, block_b=block_b,
                                 single_buffer_weights=True)
        except Exception:
            # This jax build rejects pipeline_mode on pallas_call BlockSpecs:
            # fall back to default double-buffered specs (still correct,
            # just ~2x the weights' VMEM footprint).
            _SINGLE_BUFFER_OK = False
    return _forward_impl(observations, padded_params,
                         action_size=action_size, block_b=block_b,
                         single_buffer_weights=False)


# ---------------------------------------------------------------------------
# Init + references
# ---------------------------------------------------------------------------
def init_params(key, obs_size, hidden_size, action_size):
    """Deterministic init mirroring nn.Linear's U(-1/sqrt(fan_in), 1/sqrt(fan_in))."""
    dims = [(obs_size, hidden_size),
            (hidden_size, hidden_size),
            (hidden_size, hidden_size),
            (hidden_size, action_size)]
    params = {}
    for idx, (fan_in, fan_out) in enumerate(dims, start=1):
        key, kw, kb = jax.random.split(key, 3)
        bound = 1.0 / jnp.sqrt(fan_in)
        params[f"w{idx}"] = jax.random.uniform(
            kw, (fan_in, fan_out), jnp.float32, -bound, bound)
        params[f"b{idx}"] = jax.random.uniform(
            kb, (1, fan_out), jnp.float32, -bound, bound)
    return params


def reference_forward(observations, params):
    """Pure-JAX reference mirroring the kernel numerics
    (bf16 matmul inputs, f32 accumulation, f32 bias/ReLU)."""
    def lin(x, w, b):
        return jnp.dot(x.astype(jnp.bfloat16), w.astype(jnp.bfloat16),
                       preferred_element_type=jnp.float32) + b
    h = jnp.maximum(lin(observations, params["w1"], params["b1"]), 0.0)
    h = jnp.maximum(lin(h, params["w2"], params["b2"]), 0.0)
    h = jnp.maximum(lin(h, params["w3"], params["b3"]), 0.0)
    return lin(h, params["w4"], params["b4"])


def reference_forward_f32(observations, params):
    """Full-precision reference (module semantics)."""
    h = jnp.maximum(observations @ params["w1"] + params["b1"], 0.0)
    h = jnp.maximum(h @ params["w2"] + params["b2"], 0.0)
    h = jnp.maximum(h @ params["w3"] + params["b3"], 0.0)
    return h @ params["w4"] + params["b4"]


# ---------------------------------------------------------------------------
# Demo
# ---------------------------------------------------------------------------
if __name__ == "__main__":
    obs_size, action_size, hidden_size = 16, 8, 32
    batch = 512   # default block_b auto-splits into 2 x 256-row tiles

    key = jax.random.PRNGKey(0)
    key, k_obs = jax.random.split(key)
    observations = jax.random.normal(k_obs, (batch, obs_size), jnp.float32)
    params = init_params(key, obs_size, hidden_size, action_size)

    # Pad + cast once, outside the hot path (perf review item #1).
    padded_params = prepare_params(params)
    padded_params = jax.block_until_ready(padded_params)

    out = mlp_policy_forward(observations, padded_params,
                             action_size=action_size)
    out = jax.block_until_ready(out)

    assert out.shape == (batch, action_size)

    ref_bf16 = reference_forward(observations, params)
    ref_f32 = reference_forward_f32(observations, params)
    assert jnp.allclose(out, ref_bf16, atol=2e-3, rtol=2e-3), \
        "mismatch vs bf16-matmul reference"
    assert jnp.allclose(out, ref_f32, atol=5e-2, rtol=5e-2), \
        "mismatch vs f32 reference"

    print("KERNEL_OK")
</pallas_src>

<mosaic_0001>
module attributes {stable_mosaic.version = 11 : i64} {
  func.func @_mlp_policy_kernel(%arg0: i32, %arg1: memref<256x16xf32, #tpu.memory_space<vmem>>, %arg2: memref<16x128xbf16, #tpu.memory_space<vmem>>, %arg3: memref<1x128xf32, #tpu.memory_space<vmem>>, %arg4: memref<128x128xbf16, #tpu.memory_space<vmem>>, %arg5: memref<1x128xf32, #tpu.memory_space<vmem>>, %arg6: memref<128x128xbf16, #tpu.memory_space<vmem>>, %arg7: memref<1x128xf32, #tpu.memory_space<vmem>>, %arg8: memref<128x128xbf16, #tpu.memory_space<vmem>>, %arg9: memref<1x128xf32, #tpu.memory_space<vmem>>, %arg10: memref<256x128xf32, #tpu.memory_space<vmem>>) attributes {dimension_semantics = [#tpu.dimension_semantics<parallel>], iteration_bounds = array<i64: 2>, scalar_prefetch = 0 : i64, scratch_operands = 0 : i64, tpu.core_type = #tpu.core_type<tc>, window_params = [{transform_indices = @transform_0, window_bounds = array<i64: 256, 16>}, {pipeline_mode = #tpu.pipeline_mode<synchronous>, transform_indices = @transform_1, window_bounds = array<i64: 16, 128>}, {pipeline_mode = #tpu.pipeline_mode<synchronous>, transform_indices = @transform_2, window_bounds = array<i64: 1, 128>}, {pipeline_mode = #tpu.pipeline_mode<synchronous>, transform_indices = @transform_3, window_bounds = array<i64: 128, 128>}, {pipeline_mode = #tpu.pipeline_mode<synchronous>, transform_indices = @transform_4, window_bounds = array<i64: 1, 128>}, {pipeline_mode = #tpu.pipeline_mode<synchronous>, transform_indices = @transform_5, window_bounds = array<i64: 128, 128>}, {pipeline_mode = #tpu.pipeline_mode<synchronous>, transform_indices = @transform_6, window_bounds = array<i64: 1, 128>}, {pipeline_mode = #tpu.pipeline_mode<synchronous>, transform_indices = @transform_7, window_bounds = array<i64: 128, 128>}, {pipeline_mode = #tpu.pipeline_mode<synchronous>, transform_indices = @transform_8, window_bounds = array<i64: 1, 128>}, {transform_indices = @transform_9, window_bounds = array<i64: 256, 128>}]} {
    %c0 = arith.constant 0 : index
    %c0_0 = arith.constant 0 : index
    %0 = vector.load %arg1[%c0, %c0_0] : memref<256x16xf32, #tpu.memory_space<vmem>>, vector<256x16xf32>
    %1 = arith.truncf %0 : vector<256x16xf32> to vector<256x16xbf16>
    %c0_1 = arith.constant 0 : index
    %c0_2 = arith.constant 0 : index
    %2 = vector.load %arg2[%c0_1, %c0_2] : memref<16x128xbf16, #tpu.memory_space<vmem>>, vector<16x128xbf16>
    %cst = arith.constant dense<0.000000e+00> : vector<256x128xf32>
    %3 = tpu.matmul %1, %2, %cst {dimension_numbers = #tpu.dot_dimension_numbers<[1], [0], [0], [1], [0, 0, 1, 1], [], []>} : vector<256x16xbf16>, vector<16x128xbf16>, vector<256x128xf32> -> vector<256x128xf32>
    %c0_3 = arith.constant 0 : index
    %c0_4 = arith.constant 0 : index
    %4 = vector.load %arg3[%c0_3, %c0_4] : memref<1x128xf32, #tpu.memory_space<vmem>>, vector<1x128xf32>
    %5 = vector.broadcast %4 : vector<1x128xf32> to vector<256x128xf32>
    %6 = arith.addf %3, %5 : vector<256x128xf32>
    %cst_5 = arith.constant 0.000000e+00 : f32
    %7 = vector.broadcast %cst_5 : f32 to vector<256x128xf32>
    %8 = arith.maximumf %6, %7 : vector<256x128xf32>
    %9 = arith.truncf %8 : vector<256x128xf32> to vector<256x128xbf16>
    %c0_6 = arith.constant 0 : index
    %c0_7 = arith.constant 0 : index
    %10 = vector.load %arg4[%c0_6, %c0_7] : memref<128x128xbf16, #tpu.memory_space<vmem>>, vector<128x128xbf16>
    %cst_8 = arith.constant dense<0.000000e+00> : vector<256x128xf32>
    %11 = tpu.matmul %9, %10, %cst_8 {dimension_numbers = #tpu.dot_dimension_numbers<[1], [0], [0], [1], [0, 0, 1, 1], [], []>} : vector<256x128xbf16>, vector<128x128xbf16>, vector<256x128xf32> -> vector<256x128xf32>
    %c0_9 = arith.constant 0 : index
    %c0_10 = arith.constant 0 : index
    %12 = vector.load %arg5[%c0_9, %c0_10] : memref<1x128xf32, #tpu.memory_space<vmem>>, vector<1x128xf32>
    %13 = vector.broadcast %12 : vector<1x128xf32> to vector<256x128xf32>
    %14 = arith.addf %11, %13 : vector<256x128xf32>
    %cst_11 = arith.constant 0.000000e+00 : f32
    %15 = vector.broadcast %cst_11 : f32 to vector<256x128xf32>
    %16 = arith.maximumf %14, %15 : vector<256x128xf32>
    %17 = arith.truncf %16 : vector<256x128xf32> to vector<256x128xbf16>
    %c0_12 = arith.constant 0 : index
    %c0_13 = arith.constant 0 : index
    %18 = vector.load %arg6[%c0_12, %c0_13] : memref<128x128xbf16, #tpu.memory_space<vmem>>, vector<128x128xbf16>
    %cst_14 = arith.constant dense<0.000000e+00> : vector<256x128xf32>
    %19 = tpu.matmul %17, %18, %cst_14 {dimension_numbers = #tpu.dot_dimension_numbers<[1], [0], [0], [1], [0, 0, 1, 1], [], []>} : vector<256x128xbf16>, vector<128x128xbf16>, vector<256x128xf32> -> vector<256x128xf32>
    %c0_15 = arith.constant 0 : index
    %c0_16 = arith.constant 0 : index
    %20 = vector.load %arg7[%c0_15, %c0_16] : memref<1x128xf32, #tpu.memory_space<vmem>>, vector<1x128xf32>
    %21 = vector.broadcast %20 : vector<1x128xf32> to vector<256x128xf32>
    %22 = arith.addf %19, %21 : vector<256x128xf32>
    %cst_17 = arith.constant 0.000000e+00 : f32
    %23 = vector.broadcast %cst_17 : f32 to vector<256x128xf32>
    %24 = arith.maximumf %22, %23 : vector<256x128xf32>
    %25 = arith.truncf %24 : vector<256x128xf32> to vector<256x128xbf16>
    %c0_18 = arith.constant 0 : index
    %c0_19 = arith.constant 0 : index
    %26 = vector.load %arg8[%c0_18, %c0_19] : memref<128x128xbf16, #tpu.memory_space<vmem>>, vector<128x128xbf16>
    %cst_20 = arith.constant dense<0.000000e+00> : vector<256x128xf32>
    %27 = tpu.matmul %25, %26, %cst_20 {dimension_numbers = #tpu.dot_dimension_numbers<[1], [0], [0], [1], [0, 0, 1, 1], [], []>} : vector<256x128xbf16>, vector<128x128xbf16>, vector<256x128xf32> -> vector<256x128xf32>
    %c0_21 = arith.constant 0 : index
    %c0_22 = arith.constant 0 : index
    %28 = vector.load %arg9[%c0_21, %c0_22] : memref<1x128xf32, #tpu.memory_space<vmem>>, vector<1x128xf32>
    %29 = vector.broadcast %28 : vector<1x128xf32> to vector<256x128xf32>
    %30 = arith.addf %27, %29 : vector<256x128xf32>
    %c0_23 = arith.constant 0 : index
    %c0_24 = arith.constant 0 : index
    %31 = vector.load %arg10[%c0_23, %c0_24] : memref<256x128xf32, #tpu.memory_space<vmem>>, vector<256x128xf32>
    tpu.vector_store %arg10[%c0_23, %c0_24], %30 {strides = array<i32>} : memref<256x128xf32, #tpu.memory_space<vmem>>, vector<256x128xf32>,
    return
  }
  func.func @transform_0(%arg0: i32) -> (i32, i32) {
    %c0_i32 = arith.constant 0 : i32
    %c0_i32_0 = arith.constant 0 : i32
    return %arg0, %c0_i32 : i32, i32
  }
  func.func @transform_1(%arg0: i32) -> (i32, i32) {
    %c0_i32 = arith.constant 0 : i32
    %c0_i32_0 = arith.constant 0 : i32
    %c0_i32_1 = arith.constant 0 : i32
    return %c0_i32, %c0_i32_0 : i32, i32
  }
  func.func @transform_2(%arg0: i32) -> (i32, i32) {
    %c0_i32 = arith.constant 0 : i32
    %c0_i32_0 = arith.constant 0 : i32
    %c0_i32_1 = arith.constant 0 : i32
    return %c0_i32, %c0_i32_0 : i32, i32
  }
  func.func @transform_3(%arg0: i32) -> (i32, i32) {
    %c0_i32 = arith.constant 0 : i32
    %c0_i32_0 = arith.constant 0 : i32
    %c0_i32_1 = arith.constant 0 : i32
    return %c0_i32, %c0_i32_0 : i32, i32
  }
  func.func @transform_4(%arg0: i32) -> (i32, i32) {
    %c0_i32 = arith.constant 0 : i32
    %c0_i32_0 = arith.constant 0 : i32
    %c0_i32_1 = arith.constant 0 : i32
    return %c0_i32, %c0_i32_0 : i32, i32
  }
  func.func @transform_5(%arg0: i32) -> (i32, i32) {
    %c0_i32 = arith.constant 0 : i32
    %c0_i32_0 = arith.constant 0 : i32
    %c0_i32_1 = arith.constant 0 : i32
    return %c0_i32, %c0_i32_0 : i32, i32
  }
  func.func @transform_6(%arg0: i32) -> (i32, i32) {
    %c0_i32 = arith.constant 0 : i32
    %c0_i32_0 = arith.constant 0 : i32
    %c0_i32_1 = arith.constant 0 : i32
    return %c0_i32, %c0_i32_0 : i32, i32
  }
  func.func @transform_7(%arg0: i32) -> (i32, i32) {
    %c0_i32 = arith.constant 0 : i32
    %c0_i32_0 = arith.constant 0 : i32
    %c0_i32_1 = arith.constant 0 : i32
    return %c0_i32, %c0_i32_0 : i32, i32
  }
  func.func @transform_8(%arg0: i32) -> (i32, i32) {
    %c0_i32 = arith.constant 0 : i32
    %c0_i32_0 = arith.constant 0 : i32
    %c0_i32_1 = arith.constant 0 : i32
    return %c0_i32, %c0_i32_0 : i32, i32
  }
  func.func @transform_9(%arg0: i32) -> (i32, i32) {
    %c0_i32 = arith.constant 0 : i32
    %c0_i32_0 = arith.constant 0 : i32
    return %arg0, %c0_i32 : i32, i32
  }
}

module attributes {stable_mosaic.version = 11 : i64} {
  func.func @_mlp_policy_kernel(%arg0: i32, %arg1: memref<256x16xf32, #tpu.memory_space<vmem>>, %arg2: memref<16x128xbf16, #tpu.memory_space<vmem>>, %arg3: memref<1x128xf32, #tpu.memory_space<vmem>>, %arg4: memref<128x128xbf16, #tpu.memory_space<vmem>>, %arg5: memref<1x128xf32, #tpu.memory_space<vmem>>, %arg6: memref<128x128xbf16, #tpu.memory_space<vmem>>, %arg7: memref<1x128xf32, #tpu.memory_space<vmem>>, %arg8: memref<128x128xbf16, #tpu.memory_space<vmem>>, %arg9: memref<1x128xf32, #tpu.memory_space<vmem>>, %arg10: memref<256x128xf32, #tpu.memory_space<vmem>>) attributes {dimension_semantics = [#tpu.dimension_semantics<parallel>], iteration_bounds = array<i64: 2>, scalar_prefetch = 0 : i64, scratch_operands = 0 : i64, tpu.core_type = #tpu.core_type<tc>, window_params = [{transform_indices = @transform_0, window_bounds = array<i64: 256, 16>}, {pipeline_mode = #tpu.pipeline_mode<synchronous>, transform_indices = @transform_1, window_bounds = array<i64: 16, 128>}, {pipeline_mode = #tpu.pipeline_mode<synchronous>, transform_indices = @transform_2, window_bounds = array<i64: 1, 128>}, {pipeline_mode = #tpu.pipeline_mode<synchronous>, transform_indices = @transform_3, window_bounds = array<i64: 128, 128>}, {pipeline_mode = #tpu.pipeline_mode<synchronous>, transform_indices = @transform_4, window_bounds = array<i64: 1, 128>}, {pipeline_mode = #tpu.pipeline_mode<synchronous>, transform_indices = @transform_5, window_bounds = array<i64: 128, 128>}, {pipeline_mode = #tpu.pipeline_mode<synchronous>, transform_indices = @transform_6, window_bounds = array<i64: 1, 128>}, {pipeline_mode = #tpu.pipeline_mode<synchronous>, transform_indices = @transform_7, window_bounds = array<i64: 128, 128>}, {pipeline_mode = #tpu.pipeline_mode<synchronous>, transform_indices = @transform_8, window_bounds = array<i64: 1, 128>}, {transform_indices = @transform_9, window_bounds = array<i64: 256, 128>}]} {
    %c0 = arith.constant 0 : index
    %c0_0 = arith.constant 0 : index
    %0 = vector.load %arg1[%c0, %c0_0] : memref<256x16xf32, #tpu.memory_space<vmem>>, vector<256x16xf32>
    %1 = arith.truncf %0 : vector<256x16xf32> to vector<256x16xbf16>
    %c0_1 = arith.constant 0 : index
    %c0_2 = arith.constant 0 : index
    %2 = vector.load %arg2[%c0_1, %c0_2] : memref<16x128xbf16, #tpu.memory_space<vmem>>, vector<16x128xbf16>
    %cst = arith.constant dense<0.000000e+00> : vector<256x128xf32>
    %3 = tpu.matmul %1, %2, %cst {dimension_numbers = #tpu.dot_dimension_numbers<[1], [0], [0], [1], [0, 0, 1, 1], [], []>} : vector<256x16xbf16>, vector<16x128xbf16>, vector<256x128xf32> -> vector<256x128xf32>
    %c0_3 = arith.constant 0 : index
    %c0_4 = arith.constant 0 : index
    %4 = vector.load %arg3[%c0_3, %c0_4] : memref<1x128xf32, #tpu.memory_space<vmem>>, vector<1x128xf32>
    %5 = vector.broadcast %4 : vector<1x128xf32> to vector<256x128xf32>
    %6 = arith.addf %3, %5 : vector<256x128xf32>
    %cst_5 = arith.constant 0.000000e+00 : f32
    %7 = vector.broadcast %cst_5 : f32 to vector<256x128xf32>
    %8 = arith.maximumf %6, %7 : vector<256x128xf32>
    %9 = arith.truncf %8 : vector<256x128xf32> to vector<256x128xbf16>
    %c0_6 = arith.constant 0 : index
    %c0_7 = arith.constant 0 : index
    %10 = vector.load %arg4[%c0_6, %c0_7] : memref<128x128xbf16, #tpu.memory_space<vmem>>, vector<128x128xbf16>
    %cst_8 = arith.constant dense<0.000000e+00> : vector<256x128xf32>
    %11 = tpu.matmul %9, %10, %cst_8 {dimension_numbers = #tpu.dot_dimension_numbers<[1], [0], [0], [1], [0, 0, 1, 1], [], []>} : vector<256x128xbf16>, vector<128x128xbf16>, vector<256x128xf32> -> vector<256x128xf32>
    %c0_9 = arith.constant 0 : index
    %c0_10 = arith.constant 0 : index
    %12 = vector.load %arg5[%c0_9, %c0_10] : memref<1x128xf32, #tpu.memory_space<vmem>>, vector<1x128xf32>
    %13 = vector.broadcast %12 : vector<1x128xf32> to vector<256x128xf32>
    %14 = arith.addf %11, %13 : vector<256x128xf32>
    %cst_11 = arith.constant 0.000000e+00 : f32
    %15 = vector.broadcast %cst_11 : f32 to vector<256x128xf32>
    %16 = arith.maximumf %14, %15 : vector<256x128xf32>
    %17 = arith.truncf %16 : vector<256x128xf32> to vector<256x128xbf16>
    %c0_12 = arith.constant 0 : index
    %c0_13 = arith.constant 0 : index
    %18 = vector.load %arg6[%c0_12, %c0_13] : memref<128x128xbf16, #tpu.memory_space<vmem>>, vector<128x128xbf16>
    %cst_14 = arith.constant dense<0.000000e+00> : vector<256x128xf32>
    %19 = tpu.matmul %17, %18, %cst_14 {dimension_numbers = #tpu.dot_dimension_numbers<[1], [0], [0], [1], [0, 0, 1, 1], [], []>} : vector<256x128xbf16>, vector<128x128xbf16>, vector<256x128xf32> -> vector<256x128xf32>
    %c0_15 = arith.constant 0 : index
    %c0_16 = arith.constant 0 : index
    %20 = vector.load %arg7[%c0_15, %c0_16] : memref<1x128xf32, #tpu.memory_space<vmem>>, vector<1x128xf32>
    %21 = vector.broadcast %20 : vector<1x128xf32> to vector<256x128xf32>
    %22 = arith.addf %19, %21 : vector<256x128xf32>
    %cst_17 = arith.constant 0.000000e+00 : f32
    %23 = vector.broadcast %cst_17 : f32 to vector<256x128xf32>
    %24 = arith.maximumf %22, %23 : vector<256x128xf32>
    %25 = arith.truncf %24 : vector<256x128xf32> to vector<256x128xbf16>
    %c0_18 = arith.constant 0 : index
    %c0_19 = arith.constant 0 : index
    %26 = vector.load %arg8[%c0_18, %c0_19] : memref<128x128xbf16, #tpu.memory_space<vmem>>, vector<128x128xbf16>
    %cst_20 = arith.constant dense<0.000000e+00> : vector<256x128xf32>
    %27 = tpu.matmul %25, %26, %cst_20 {dimension_numbers = #tpu.dot_dimension_numbers<[1], [0], [0], [1], [0, 0, 1, 1], [], []>} : vector<256x128xbf16>, vector<128x128xbf16>, vector<256x128xf32> -> vector<256x128xf32>
    %c0_21 = arith.constant 0 : index
    %c0_22 = arith.constant 0 : index
    %28 = vector.load %arg9[%c0_21, %c0_22] : memref<1x128xf32, #tpu.memory_space<vmem>>, vector<1x128xf32>
    %29 = vector.broadcast %28 : vector<1x128xf32> to vector<256x128xf32>
    %30 = arith.addf %27, %29 : vector<256x128xf32>
    %c0_23 = arith.constant 0 : index
    %c0_24 = arith.constant 0 : index
    %31 = vector.load %arg10[%c0_23, %c0_24] : memref<256x128xf32, #tpu.memory_space<vmem>>, vector<256x128xf32>
    tpu.vector_store %arg10[%c0_23, %c0_24], %30 {strides = array<i32>} : memref<256x128xf32, #tpu.memory_space<vmem>>, vector<256x128xf32>,
    return
  }
  func.func @transform_0(%arg0: i32) -> (i32, i32) {
    %c0_i32 = arith.constant 0 : i32
    %c0_i32_0 = arith.constant 0 : i32
    return %arg0, %c0_i32 : i32, i32
  }
  func.func @transform_1(%arg0: i32) -> (i32, i32) {
    %c0_i32 = arith.constant 0 : i32
    %c0_i32_0 = arith.constant 0 : i32
    %c0_i32_1 = arith.constant 0 : i32
    return %c0_i32, %c0_i32_0 : i32, i32
  }
  func.func @transform_2(%arg0: i32) -> (i32, i32) {
    %c0_i32 = arith.constant 0 : i32
    %c0_i32_0 = arith.constant 0 : i32
    %c0_i32_1 = arith.constant 0 : i32
    return %c0_i32, %c0_i32_0 : i32, i32
  }
  func.func @transform_3(%arg0: i32) -> (i32, i32) {
    %c0_i32 = arith.constant 0 : i32
    %c0_i32_0 = arith.constant 0 : i32
    %c0_i32_1 = arith.constant 0 : i32
    return %c0_i32, %c0_i32_0 : i32, i32
  }
  func.func @transform_4(%arg0: i32) -> (i32, i32) {
    %c0_i32 = arith.constant 0 : i32
    %c0_i32_0 = arith.constant 0 : i32
    %c0_i32_1 = arith.constant 0 : i32
    return %c0_i32, %c0_i32_0 : i32, i32
  }
  func.func @transform_5(%arg0: i32) -> (i32, i32) {
    %c0_i32 = arith.constant 0 : i32
    %c0_i32_0 = arith.constant 0 : i32
    %c0_i32_1 = arith.constant 0 : i32
    return %c0_i32, %c0_i32_0 : i32, i32
  }
  func.func @transform_6(%arg0: i32) -> (i32, i32) {
    %c0_i32 = arith.constant 0 : i32
    %c0_i32_0 = arith.constant 0 : i32
    %c0_i32_1 = arith.constant 0 : i32
    return %c0_i32, %c0_i32_0 : i32, i32
  }
  func.func @transform_7(%arg0: i32) -> (i32, i32) {
    %c0_i32 = arith.constant 0 : i32
    %c0_i32_0 = arith.constant 0 : i32
    %c0_i32_1 = arith.constant 0 : i32
    return %c0_i32, %c0_i32_0 : i32, i32
  }
  func.func @transform_8(%arg0: i32) -> (i32, i32) {
    %c0_i32 = arith.constant 0 : i32
    %c0_i32_0 = arith.constant 0 : i32
    %c0_i32_1 = arith.constant 0 : i32
    return %c0_i32, %c0_i32_0 : i32, i32
  }
  func.func @transform_9(%arg0: i32) -> (i32, i32) {
    %c0_i32 = arith.constant 0 : i32
    %c0_i32_0 = arith.constant 0 : i32
    return %arg0, %c0_i32 : i32, i32
  }
}

</mosaic_0001>

<llo_original>
// kernel: _forward_impl.1
$region0: #{_forward_impl.1}
  #allocation0 [shape = 'u32[]', space=smem, size = 0x4, offset = 0x4, fixed_abs, tag = 'smem constant byte address 0x4 - core index']
  #allocation1 [shape = 'u32[72,128]{1,0:T(1,128)}', space=vmem, size = 0x9000, scoped, tag = 'internal scratch']
  %s0 = inlined_call_operand.vmem [shape: f32[512,16], index: 0, kind: input, shape index: {}]
  %s1 = inlined_call_operand.vmem [shape: bf16[16,128], index: 1, kind: input, shape index: {}]
  %s2 = inlined_call_operand.vmem [shape: f32[1,128], index: 2, kind: input, shape index: {}]
  %s3 = inlined_call_operand.vmem [shape: bf16[128,128], index: 3, kind: input, shape index: {}]
  %s4 = inlined_call_operand.vmem [shape: f32[1,128], index: 4, kind: input, shape index: {}]
  %s5 = inlined_call_operand.vmem [shape: bf16[128,128], index: 5, kind: input, shape index: {}]
  %s6 = inlined_call_operand.vmem [shape: f32[1,128], index: 6, kind: input, shape index: {}]
  %s7 = inlined_call_operand.vmem [shape: bf16[128,128], index: 7, kind: input, shape index: {}]
  %s8 = inlined_call_operand.vmem [shape: f32[1,128], index: 8, kind: input, shape index: {}]
  %s9 = inlined_call_operand.vmem [shape: f32[512,128], index: 9, kind: output, shape index: {}]
  %s10 = sld [smem:[#allocation0]]
  $region69: #{_forward_impl.1} parent=0
    _
  %s12 = ssub.s32 1, %s10
  %s13 = scalar_select 0, %s12, %s10
  loop: start=0, step=1, limit=4
  $region2: #{_forward_impl.1} parent=0 // loop_pre_header
    _
  $region3: #{_forward_impl.1} parent=0 // loop_header
    %s15 = sphi 0, %s19
    %p16 = scmp.ge.s32.totalorder %s15, 4
    %s25 = sphi 0, %s27
    %s28 = sphi 0, %s25
    %s29 = sphi 0, %s28
    %s45 = sphi 0, %s29
    %s49 = sphi 0, %s49
    %s51 = sphi 0, %s49
    %s52 = sphi 0, %s51
    %s66 = sphi 0, %s52
    %s70 = sphi 0, %s70
    %s72 = sphi 0, %s70
    %s73 = sphi 0, %s72
    %s87 = sphi 0, %s73
    %s91 = sphi 0, %s91
    %s93 = sphi 0, %s91
    %s94 = sphi 0, %s93
    %s108 = sphi 0, %s94
    %s112 = sphi 0, %s112
    %s114 = sphi 0, %s112
    %s115 = sphi 0, %s114
    %s129 = sphi 0, %s115
    %s133 = sphi 0, %s133
    %s135 = sphi 0, %s133
    %s136 = sphi 0, %s135
    %s150 = sphi 0, %s136
    %s154 = sphi 0, %s154
    %s156 = sphi 0, %s154
    %s157 = sphi 0, %s156
    %s171 = sphi 0, %s157
    %s175 = sphi 0, %s175
    %s177 = sphi 0, %s175
    %s178 = sphi 0, %s177
    %s192 = sphi 0, %s178
    %s196 = sphi 0, %s196
    %s198 = sphi 0, %s196
    %s199 = sphi 0, %s198
    %s213 = sphi 0, %s199
    %s219 = sphi 0, %s221
    %s222 = sphi 0, %s219
    %s223 = sphi 0, %s222
    %s239 = sphi 0, %s223
  $region4: #{_forward_impl.1} parent=0 // loop_header_branch
    %18 = sbr.rel (%p16) target = $region8
  $region5: #{_forward_impl.1} parent=0 // loop_body
    %s20 = ssub.s32 %s15, 1
    %s21 = ssub.s32 %s15, 2
    %s22 = sadd.s32 %s15, 1
    %s23 = ssub.s32 %s15, %s22
    %p24 = scmp.eq.s32.totalorder %s23, 0
    %s26 = sadd.s32 %s25, 1
    %s27 = scalar_select %p24, %s25, %s26
    %p30 = pneg %p24
    %p31 = scmp.eq.s32.totalorder %s15, 1
    %p32 = por %p30, %p31
    %p33 = scmp.ne.s32.totalorder %s25, %s28
    %p34 = scmp.eq.s32.totalorder %s15, 0
    %p35 = por %p33, %p34
    %p36 = scmp.ne.s32.totalorder %s25, %s28
    %p37 = scmp.eq.s32.totalorder %s20, 1
    %p38 = por %p36, %p37
    %p39 = scmp.ne.s32.totalorder %s28, %s29
    %p40 = scmp.eq.s32.totalorder %s20, 0
    %p41 = por %p39, %p40
    %p42 = scmp.ne.s32.totalorder %s28, %s29
    %p43 = scmp.eq.s32.totalorder %s21, 1
    %p44 = por %p42, %p43
    %p46 = scmp.ne.s32.totalorder %s29, %s45
    %p47 = scmp.eq.s32.totalorder %s21, 0
    %p48 = por %p46, %p47
    %s50 = sadd.s32 %s49, 1
    %p53 = scmp.eq.s32.totalorder %s15, 1
    %p54 = scmp.ne.s32.totalorder %s49, %s51
    %p55 = scmp.eq.s32.totalorder %s15, 0
    %p56 = por %p54, %p55
    %p57 = scmp.ne.s32.totalorder %s49, %s51
    %p58 = scmp.eq.s32.totalorder %s20, 1
    %p59 = por %p57, %p58
    %p60 = scmp.ne.s32.totalorder %s51, %s52
    %p61 = scmp.eq.s32.totalorder %s20, 0
    %p62 = por %p60, %p61
    %p63 = scmp.ne.s32.totalorder %s51, %s52
    %p64 = scmp.eq.s32.totalorder %s21, 1
    %p65 = por %p63, %p64
    %p67 = scmp.ne.s32.totalorder %s52, %s66
    %p68 = scmp.eq.s32.totalorder %s21, 0
    %p69 = por %p67, %p68
    %s71 = sadd.s32 %s70, 1
    %p74 = scmp.eq.s32.totalorder %s15, 1
    %p75 = scmp.ne.s32.totalorder %s70, %s72
    %p76 = scmp.eq.s32.totalorder %s15, 0
    %p77 = por %p75, %p76
    %p78 = scmp.ne.s32.totalorder %s70, %s72
    %p79 = scmp.eq.s32.totalorder %s20, 1
    %p80 = por %p78, %p79
    %p81 = scmp.ne.s32.totalorder %s72, %s73
    %p82 = scmp.eq.s32.totalorder %s20, 0
    %p83 = por %p81, %p82
    %p84 = scmp.ne.s32.totalorder %s72, %s73
    %p85 = scmp.eq.s32.totalorder %s21, 1
    %p86 = por %p84, %p85
    %p88 = scmp.ne.s32.totalorder %s73, %s87
    %p89 = scmp.eq.s32.totalorder %s21, 0
    %p90 = por %p88, %p89
    %s92 = sadd.s32 %s91, 1
    %p95 = scmp.eq.s32.totalorder %s15, 1
    %p96 = scmp.ne.s32.totalorder %s91, %s93
    %p97 = scmp.eq.s32.totalorder %s15, 0
    %p98 = por %p96, %p97
    %p99 = scmp.ne.s32.totalorder %s91, %s93
    %p100 = scmp.eq.s32.totalorder %s20, 1
    %p101 = por %p99, %p100
    %p102 = scmp.ne.s32.totalorder %s93, %s94
    %p103 = scmp.eq.s32.totalorder %s20, 0
    %p104 = por %p102, %p103
    %p105 = scmp.ne.s32.totalorder %s93, %s94
    %p106 = scmp.eq.s32.totalorder %s21, 1
    %p107 = por %p105, %p106
    %p109 = scmp.ne.s32.totalorder %s94, %s108
    %p110 = scmp.eq.s32.totalorder %s21, 0
    %p111 = por %p109, %p110
    %s113 = sadd.s32 %s112, 1
    %p116 = scmp.eq.s32.totalorder %s15, 1
    %p117 = scmp.ne.s32.totalorder %s112, %s114
    %p118 = scmp.eq.s32.totalorder %s15, 0
    %p119 = por %p117, %p118
    %p120 = scmp.ne.s32.totalorder %s112, %s114
    %p121 = scmp.eq.s32.totalorder %s20, 1
    %p122 = por %p120, %p121
    %p123 = scmp.ne.s32.totalorder %s114, %s115
    %p124 = scmp.eq.s32.totalorder %s20, 0
    %p125 = por %p123, %p124
    %p126 = scmp.ne.s32.totalorder %s114, %s115
    %p127 = scmp.eq.s32.totalorder %s21, 1
    %p128 = por %p126, %p127
    %p130 = scmp.ne.s32.totalorder %s115, %s129
    %p131 = scmp.eq.s32.totalorder %s21, 0
    %p132 = por %p130, %p131
    %s134 = sadd.s32 %s133, 1
    %p137 = scmp.eq.s32.totalorder %s15, 1
    %p138 = scmp.ne.s32.totalorder %s133, %s135
    %p139 = scmp.eq.s32.totalorder %s15, 0
    %p140 = por %p138, %p139
    %p141 = scmp.ne.s32.totalorder %s133, %s135
    %p142 = scmp.eq.s32.totalorder %s20, 1
    %p143 = por %p141, %p142
    %p144 = scmp.ne.s32.totalorder %s135, %s136
    %p145 = scmp.eq.s32.totalorder %s20, 0
    %p146 = por %p144, %p145
    %p147 = scmp.ne.s32.totalorder %s135, %s136
    %p148 = scmp.eq.s32.totalorder %s21, 1
    %p149 = por %p147, %p148
    %p151 = scmp.ne.s32.totalorder %s136, %s150
    %p152 = scmp.eq.s32.totalorder %s21, 0
    %p153 = por %p151, %p152
    %s155 = sadd.s32 %s154, 1
    %p158 = scmp.eq.s32.totalorder %s15, 1
    %p159 = scmp.ne.s32.totalorder %s154, %s156
    %p160 = scmp.eq.s32.totalorder %s15, 0
    %p161 = por %p159, %p160
    %p162 = scmp.ne.s32.totalorder %s154, %s156
    %p163 = scmp.eq.s32.totalorder %s20, 1
    %p164 = por %p162, %p163
    %p165 = scmp.ne.s32.totalorder %s156, %s157
    %p166 = scmp.eq.s32.totalorder %s20, 0
    %p167 = por %p165, %p166
    %p168 = scmp.ne.s32.totalorder %s156, %s157
    %p169 = scmp.eq.s32.totalorder %s21, 1
    %p170 = por %p168, %p169
    %p172 = scmp.ne.s32.totalorder %s157, %s171
    %p173 = scmp.eq.s32.totalorder %s21, 0
    %p174 = por %p172, %p173
    %s176 = sadd.s32 %s175, 1
    %p179 = scmp.eq.s32.totalorder %s15, 1
    %p180 = scmp.ne.s32.totalorder %s175, %s177
    %p181 = scmp.eq.s32.totalorder %s15, 0
    %p182 = por %p180, %p181
    %p183 = scmp.ne.s32.totalorder %s175, %s177
    %p184 = scmp.eq.s32.totalorder %s20, 1
    %p185 = por %p183, %p184
    %p186 = scmp.ne.s32.totalorder %s177, %s178
    %p187 = scmp.eq.s32.totalorder %s20, 0
    %p188 = por %p186, %p187
    %p189 = scmp.ne.s32.totalorder %s177, %s178
    %p190 = scmp.eq.s32.totalorder %s21, 1
    %p191 = por %p189, %p190
    %p193 = scmp.ne.s32.totalorder %s178, %s192
    %p194 = scmp.eq.s32.totalorder %s21, 0
    %p195 = por %p193, %p194
    %s197 = sadd.s32 %s196, 1
    %p200 = scmp.eq.s32.totalorder %s15, 1
    %p201 = scmp.ne.s32.totalorder %s196, %s198
    %p202 = scmp.eq.s32.totalorder %s15, 0
    %p203 = por %p201, %p202
    %p204 = scmp.ne.s32.totalorder %s196, %s198
    %p205 = scmp.eq.s32.totalorder %s20, 1
    %p206 = por %p204, %p205
    %p207 = scmp.ne.s32.totalorder %s198, %s199
    %p208 = scmp.eq.s32.totalorder %s20, 0
    %p209 = por %p207, %p208
    %p210 = scmp.ne.s32.totalorder %s198, %s199
    %p211 = scmp.eq.s32.totalorder %s21, 1
    %p212 = por %p210, %p211
    %p214 = scmp.ne.s32.totalorder %s199, %s213
    %p215 = scmp.eq.s32.totalorder %s21, 0
    %p216 = por %p214, %p215
    %s217 = ssub.s32 %s15, %s22
    %p218 = scmp.eq.s32.totalorder %s217, 0
    %s220 = sadd.s32 %s219, 1
    %s221 = scalar_select %p218, %s219, %s220
    %p224 = pneg %p218
    %p225 = scmp.eq.s32.totalorder %s15, 1
    %p226 = por %p224, %p225
    %p227 = scmp.ne.s32.totalorder %s219, %s222
    %p228 = scmp.eq.s32.totalorder %s15, 0
    %p229 = por %p227, %p228
    %p230 = scmp.ne.s32.totalorder %s219, %s222
    %p231 = scmp.eq.s32.totalorder %s20, 1
    %p232 = por %p230, %p231
    %p233 = scmp.ne.s32.totalorder %s222, %s223
    %p234 = scmp.eq.s32.totalorder %s20, 0
    %p235 = por %p233, %p234
    %p236 = scmp.ne.s32.totalorder %s222, %s223
    %p237 = scmp.eq.s32.totalorder %s21, 1
    %p238 = por %p236, %p237
    %p240 = scmp.ne.s32.totalorder %s223, %s239
    %p241 = scmp.eq.s32.totalorder %s21, 0
    %p242 = por %p240, %p241
    %p243 = scmp.le.s32.totalorder 1, %s15
    %p244 = scmp.lt.s32.totalorder %s15, 3
    %p245 = pnand %p243, %p244
    %p246 = pneg %p245
    // Predicated region
    $region9: #{_forward_impl.1} parent=5 // pred_check
      _
    $region10: #{_forward_impl.1} parent=5 // pred_check_branch
      %248 = sbr.rel (%p245) target = $region12
    $region11: #{_forward_impl.1} parent=5 // pred_region
      %s249 = ssub.s32 %s15, 1
      // Predicated region
      $region13: #{_forward_impl.1} parent=11 // pred_check
        %p250 = pneg %p62
      $region14: #{_forward_impl.1} parent=11 // pred_check_branch
        %252 = sbr.rel (%p250) target = $region16
      $region15: #{_forward_impl.1} parent=11 // pred_region
        _
      $region16: #{_forward_impl.1} parent=11 // pred_fallthru
        _
      // Predicated region
      $region17: #{_forward_impl.1} parent=11 // pred_check
        %p253 = pneg %p83
      $region18: #{_forward_impl.1} parent=11 // pred_check_branch
        %255 = sbr.rel (%p253) target = $region20
      $region19: #{_forward_impl.1} parent=11 // pred_region
        _
      $region20: #{_forward_impl.1} parent=11 // pred_fallthru
        _
      // Predicated region
      $region21: #{_forward_impl.1} parent=11 // pred_check
        %p256 = pneg %p104
      $region22: #{_forward_impl.1} parent=11 // pred_check_branch
        %258 = sbr.rel (%p256) target = $region24
      $region23: #{_forward_impl.1} parent=11 // pred_region
        _
      $region24: #{_forward_impl.1} parent=11 // pred_fallthru
        _
      // Predicated region
      $region25: #{_forward_impl.1} parent=11 // pred_check
        %p259 = pneg %p125
      $region26: #{_forward_impl.1} parent=11 // pred_check_branch
        %261 = sbr.rel (%p259) target = $region28
      $region27: #{_forward_impl.1} parent=11 // pred_region
        _
      $region28: #{_forward_impl.1} parent=11 // pred_fallthru
        _
      // Predicated region
      $region29: #{_forward_impl.1} parent=11 // pred_check
        %p262 = pneg %p146
      $region30: #{_forward_impl.1} parent=11 // pred_check_branch
        %264 = sbr.rel (%p262) target = $region32
      $region31: #{_forward_impl.1} parent=11 // pred_region
        _
      $region32: #{_forward_impl.1} parent=11 // pred_fallthru
        _
      // Predicated region
      $region33: #{_forward_impl.1} parent=11 // pred_check
        %p265 = pneg %p167
      $region34: #{_forward_impl.1} parent=11 // pred_check_branch
        %267 = sbr.rel (%p265) target = $region36
      $region35: #{_forward_impl.1} parent=11 // pred_region
        _
      $region36: #{_forward_impl.1} parent=11 // pred_fallthru
        _
      // Predicated region
      $region37: #{_forward_impl.1} parent=11 // pred_check
        %p268 = pneg %p188
      $region38: #{_forward_impl.1} parent=11 // pred_check_branch
        %270 = sbr.rel (%p268) target = $region40
      $region39: #{_forward_impl.1} parent=11 // pred_region
        _
      $region40: #{_forward_impl.1} parent=11 // pred_fallthru
        _
      // Predicated region
      $region41: #{_forward_impl.1} parent=11 // pred_check
        %p271 = pneg %p209
      $region42: #{_forward_impl.1} parent=11 // pred_check_branch
        %273 = sbr.rel (%p271) target = $region44
      $region43: #{_forward_impl.1} parent=11 // pred_region
        _
      $region44: #{_forward_impl.1} parent=11 // pred_fallthru
        _
    $region12: #{_forward_impl.1} parent=5 // pred_fallthru
      _
    %p274 = scmp.lt.s32.totalorder %s15, 2
    // Predicated region
    $region45: #{_forward_impl.1} parent=5 // pred_check
      %p275 = pneg %p274
    $region46: #{_forward_impl.1} parent=5 // pred_check_branch
      %277 = sbr.rel (%p275) target = $region48
    $region47: #{_forward_impl.1} parent=5 // pred_region
      // Predicated region
      $region49: #{_forward_impl.1} parent=47 // pred_check
        %p278 = pneg %p35
      $region50: #{_forward_impl.1} parent=47 // pred_check_branch
        %280 = sbr.rel (%p278) target = $region52
      $region51: #{_forward_impl.1} parent=47 // pred_region
        %s281 = smul.u32 32, %s15
        %p282 = scmp.lt.s32.totalorder %s281, 63
        %s283 = scalar_select %p282, %s281, 63
        %s284 = smul.addr %s283, 8
        %s285 = scalar_lea.vmem %s0, %s284
        %s286 = smul.u32 32, %s15
      $region52: #{_forward_impl.1} parent=47 // pred_fallthru
        _
    $region48: #{_forward_impl.1} parent=5 // pred_fallthru
      _
    %p287 = scmp.le.s32.totalorder 1, %s15
    %p288 = scmp.lt.s32.totalorder %s15, 3
    %p289 = pnand %p287, %p288
    %p290 = pneg %p289
    // Predicated region
    $region53: #{_forward_impl.1} parent=5 // pred_check
      _
    $region54: #{_forward_impl.1} parent=5 // pred_check_branch
      %292 = sbr.rel (%p289) target = $region56
    $region55: #{_forward_impl.1} parent=5 // pred_region
      %s293 = ssub.s32 %s15, 1
      %s294 = smul.u32 32, %s20
      %p295 = scmp.lt.s32.totalorder %s294, 63
      %s296 = scalar_select %p295, %s294, 63
      %s297 = smul.addr %s296, 8
      %s298 = scalar_lea.vmem %s0, %s297
      %p299 = pneg %p41
      %p300 = pneg %p38
      %p301 = pneg %p62
      %p302 = pneg %p59
      %p303 = pneg %p83
      %p304 = pneg %p80
      %p305 = pneg %p104
      %p306 = pneg %p101
      %p307 = pneg %p125
      %p308 = pneg %p122
      %p309 = pneg %p146
      %p310 = pneg %p143
      %p311 = pneg %p167
      %p312 = pneg %p164
      %p313 = pneg %p188
      %p314 = pneg %p185
      %p315 = pneg %p209
      %p316 = pneg %p206
      %p317 = pneg %p235
      %p318 = pneg %p232
      %s319 = smul.u32 32, %s20
      %p320 = scmp.lt.s32.totalorder %s319, 63
      %s321 = scalar_select %p320, %s319, 63
      %s322 = smul.addr %s321, 8
      %s323 = scalar_lea.vmem %s9, %s322
      %s324 = smul.u32 32, %s20
      %p325 = scmp.lt.s32.totalorder %s324, 63
      %s326 = scalar_select %p325, %s324, 63
      %s327 = smul.addr %s326, 8
      %s328 = scalar_lea.vmem %s0, %s327
      %s329 = smul.u32 32, %s20
      %s330 = smul.u32 32, %s20
      %p331 = scmp.lt.s32.totalorder %s330, 63
      %s332 = scalar_select %p331, %s330, 63
      %s333 = smul.addr %s332, 8
      %s334 = scalar_lea.vmem %s9, %s333
      %s335 = smul.u32 32, %s20
      %v337 = vld [vmem:[%s328] sm:$0xff]
      %v338 = vld [vmem:[%s328 + $0x8] sm:$0xff]
      %v339 = vld [vmem:[%s328 + $0x10] sm:$0xff]
      %v340 = vld [vmem:[%s328 + $0x18] sm:$0xff]
      %v341 = vld [vmem:[%s328 + $0x20] sm:$0xff]
      %v342 = vld [vmem:[%s328 + $0x28] sm:$0xff]
      %v343 = vld [vmem:[%s328 + $0x30] sm:$0xff]
      %v344 = vld [vmem:[%s328 + $0x38] sm:$0xff]
      %v345 = vld [vmem:[%s328 + $0x40] sm:$0xff]
      %v346 = vld [vmem:[%s328 + $0x48] sm:$0xff]
      %v347 = vld [vmem:[%s328 + $0x50] sm:$0xff]
      %v348 = vld [vmem:[%s328 + $0x58] sm:$0xff]
      %v349 = vld [vmem:[%s328 + $0x60] sm:$0xff]
      %v350 = vld [vmem:[%s328 + $0x68] sm:$0xff]
      %v351 = vld [vmem:[%s328 + $0x70] sm:$0xff]
      %v352 = vld [vmem:[%s328 + $0x78] sm:$0xff]
      %v353 = vld [vmem:[%s328 + $0x80] sm:$0xff]
      %v354 = vld [vmem:[%s328 + $0x88] sm:$0xff]
      %v355 = vld [vmem:[%s328 + $0x90] sm:$0xff]
      %v356 = vld [vmem:[%s328 + $0x98] sm:$0xff]
      %v357 = vld [vmem:[%s328 + $0xa0] sm:$0xff]
      %v358 = vld [vmem:[%s328 + $0xa8] sm:$0xff]
      %v359 = vld [vmem:[%s328 + $0xb0] sm:$0xff]
      %v360 = vld [vmem:[%s328 + $0xb8] sm:$0xff]
      %v361 = vld [vmem:[%s328 + $0xc0] sm:$0xff]
      %v362 = vld [vmem:[%s328 + $0xc8] sm:$0xff]
      %v363 = vld [vmem:[%s328 + $0xd0] sm:$0xff]
      %v364 = vld [vmem:[%s328 + $0xd8] sm:$0xff]
      %v365 = vld [vmem:[%s328 + $0xe0] sm:$0xff]
      %v366 = vld [vmem:[%s328 + $0xe8] sm:$0xff]
      %v367 = vld [vmem:[%s328 + $0xf0] sm:$0xff]
      %v368 = vld [vmem:[%s328 + $0xf8] sm:$0xff]
      %v369 = vpack.c.bf16 %v338, %v337
      %v370 = vpack.c.bf16 %v340, %v339
      %v371 = vpack.c.bf16 %v342, %v341
      %v372 = vpack.c.bf16 %v344, %v343
      %v373 = vpack.c.bf16 %v346, %v345
      %v374 = vpack.c.bf16 %v348, %v347
      %v375 = vpack.c.bf16 %v350, %v349
      %v376 = vpack.c.bf16 %v352, %v351
      %v377 = vpack.c.bf16 %v354, %v353
      %v378 = vpack.c.bf16 %v356, %v355
      %v379 = vpack.c.bf16 %v358, %v357
      %v380 = vpack.c.bf16 %v360, %v359
      %v381 = vpack.c.bf16 %v362, %v361
      %v382 = vpack.c.bf16 %v364, %v363
      %v383 = vpack.c.bf16 %v366, %v365
      %v384 = vpack.c.bf16 %v368, %v367
      %v385 = vld [vmem:[%s1] sm:$0xf]
      %v386 = vld [vmem:[%s1 + $0x4] sm:$0xf]
      %v387 = vld [vmem:[%s2] sm:$0x1]
      %v389 = vperm.slane %v387, 0
      %v393 = vunpack.c.l.b16 %v385
      %v394 = vunpack.c.l.b16 %v386
      %v395 = vpack.c.b16 %v394, %v393
      %vm397 = vcmask 130048
      %v399 = vsel %vm397, %v369, 0
      %v402 = vsel %vm397, %v370, 0
      %v405 = vsel %vm397, %v371, 0
      %v408 = vsel %vm397, %v372, 0
      %v411 = vsel %vm397, %v373, 0
      %v414 = vsel %vm397, %v374, 0
      %v417 = vsel %vm397, %v375, 0
      %v420 = vsel %vm397, %v376, 0
      %v423 = vsel %vm397, %v377, 0
      %v426 = vsel %vm397, %v378, 0
      %v429 = vsel %vm397, %v379, 0
      %v432 = vsel %vm397, %v380, 0
      %v435 = vsel %vm397, %v381, 0
      %v438 = vsel %vm397, %v382, 0
      %v441 = vsel %vm397, %v383, 0
      %v444 = vsel %vm397, %v384, 0
      %446 = vmatpush.bf16.msra.mxu0 0
      %447 = vmatpush.bf16.msra.mxu0 0
      %448 = vmatpush.bf16.msra.mxu0 0
      %449 = vmatpush.bf16.msra.mxu0 0
      %450 = vmatpush.bf16.msra.mxu0 0
      %451 = vmatpush.bf16.msra.mxu0 0
      %452 = vmatpush.bf16.msra.mxu0 0
      %453 = vmatpush.bf16.msra.mxu0 %v395
      %454 = vmatmul.bf16.gmra.mxu0 %v399
      %v455 = vpop.f32.mrf.mxu0
      %v456 = vadd.f32 %v389, %v455
      %v457 = vpop.f32.mrf.mxu0
      %v458 = vadd.f32 %v389, %v457
      %459 = vmatmul.bf16.gmra.mxu0 %v402
      %v460 = vpop.f32.mrf.mxu0
      %v461 = vadd.f32 %v389, %v460
      %v462 = vpop.f32.mrf.mxu0
      %v463 = vadd.f32 %v389, %v462
      %464 = vmatmul.bf16.gmra.mxu0 %v405
      %v465 = vpop.f32.mrf.mxu0
      %v466 = vadd.f32 %v389, %v465
      %v467 = vpop.f32.mrf.mxu0
      %v468 = vadd.f32 %v389, %v467
      %469 = vmatmul.bf16.gmra.mxu0 %v408
      %v470 = vpop.f32.mrf.mxu0
      %v471 = vadd.f32 %v389, %v470
      %v472 = vpop.f32.mrf.mxu0
      %v473 = vadd.f32 %v389, %v472
      %474 = vmatmul.bf16.gmra.mxu0 %v411
      %v475 = vpop.f32.mrf.mxu0
      %v476 = vadd.f32 %v389, %v475
      %v477 = vpop.f32.mrf.mxu0
      %v478 = vadd.f32 %v389, %v477
      %479 = vmatmul.bf16.gmra.mxu0 %v414
      %v480 = vpop.f32.mrf.mxu0
      %v481 = vadd.f32 %v389, %v480
      %v482 = vpop.f32.mrf.mxu0
      %v483 = vadd.f32 %v389, %v482
      %484 = vmatmul.bf16.gmra.mxu0 %v417
      %v485 = vpop.f32.mrf.mxu0
      %v486 = vadd.f32 %v389, %v485
      %v487 = vpop.f32.mrf.mxu0
      %v488 = vadd.f32 %v389, %v487
      %489 = vmatmul.bf16.gmra.mxu0 %v420
      %v490 = vpop.f32.mrf.mxu0
      %v491 = vadd.f32 %v389, %v490
      %v492 = vpop.f32.mrf.mxu0
      %v493 = vadd.f32 %v389, %v492
      %494 = vmatmul.bf16.gmra.mxu0 %v423
      %v495 = vpop.f32.mrf.mxu0
      %v496 = vadd.f32 %v389, %v495
      %v497 = vpop.f32.mrf.mxu0
      %v498 = vadd.f32 %v389, %v497
      %499 = vmatmul.bf16.gmra.mxu0 %v426
      %v500 = vpop.f32.mrf.mxu0
      %v501 = vadd.f32 %v389, %v500
      %v502 = vpop.f32.mrf.mxu0
      %v503 = vadd.f32 %v389, %v502
      %504 = vmatmul.bf16.gmra.mxu0 %v429
      %v505 = vpop.f32.mrf.mxu0
      %v506 = vadd.f32 %v389, %v505
      %v507 = vpop.f32.mrf.mxu0
      %v508 = vadd.f32 %v389, %v507
      %509 = vmatmul.bf16.gmra.mxu0 %v432
      %v510 = vpop.f32.mrf.mxu0
      %v511 = vadd.f32 %v389, %v510
      %v512 = vpop.f32.mrf.mxu0
      %v513 = vadd.f32 %v389, %v512
      %514 = vmatmul.bf16.gmra.mxu0 %v435
      %v515 = vpop.f32.mrf.mxu0
      %v516 = vadd.f32 %v389, %v515
      %v517 = vpop.f32.mrf.mxu0
      %v518 = vadd.f32 %v389, %v517
      %519 = vmatmul.bf16.gmra.mxu0 %v438
      %v520 = vpop.f32.mrf.mxu0
      %v521 = vadd.f32 %v389, %v520
      %v522 = vpop.f32.mrf.mxu0
      %v523 = vadd.f32 %v389, %v522
      %524 = vmatmul.bf16.gmra.mxu0 %v441
      %v525 = vpop.f32.mrf.mxu0
      %v526 = vadd.f32 %v389, %v525
      %v527 = vpop.f32.mrf.mxu0
      %v528 = vadd.f32 %v389, %v527
      %529 = vmatmul.bf16.gmra.mxu0 %v444
      %v530 = vpop.f32.mrf.mxu0
      %v531 = vadd.f32 %v389, %v530
      %v532 = vpop.f32.mrf.mxu0
      %v533 = vadd.f32 %v389, %v532
      %534 = vdwg.mxu0
      %v535 = vmax.f32 %v456, 0.0
      %v536 = vmax.f32 %v458, 0.0
      %v537 = vmax.f32 %v461, 0.0
      %v538 = vmax.f32 %v463, 0.0
      %v539 = vmax.f32 %v466, 0.0
      %v540 = vmax.f32 %v468, 0.0
      %v541 = vmax.f32 %v471, 0.0
      %v542 = vmax.f32 %v473, 0.0
      %v543 = vmax.f32 %v476, 0.0
      %v544 = vmax.f32 %v478, 0.0
      %v545 = vmax.f32 %v481, 0.0
      %v546 = vmax.f32 %v483, 0.0
      %v547 = vmax.f32 %v486, 0.0
      %v548 = vmax.f32 %v488, 0.0
      %v549 = vmax.f32 %v491, 0.0
      %v550 = vmax.f32 %v493, 0.0
      %v551 = vmax.f32 %v496, 0.0
      %v552 = vmax.f32 %v498, 0.0
      %v553 = vmax.f32 %v501, 0.0
      %v554 = vmax.f32 %v503, 0.0
      %v555 = vmax.f32 %v506, 0.0
      %v556 = vmax.f32 %v508, 0.0
      %v557 = vmax.f32 %v511, 0.0
      %v558 = vmax.f32 %v513, 0.0
      %v559 = vmax.f32 %v516, 0.0
      %v560 = vmax.f32 %v518, 0.0
      %v561 = vmax.f32 %v521, 0.0
      %v562 = vmax.f32 %v523, 0.0
      %v563 = vmax.f32 %v526, 0.0
      %v564 = vmax.f32 %v528, 0.0
      %v565 = vmax.f32 %v531, 0.0
      %v566 = vmax.f32 %v533, 0.0
      %v567 = vpack.c.bf16 %v536, %v535
      %v568 = vpack.c.bf16 %v538, %v537
      %v569 = vpack.c.bf16 %v540, %v539
      %v570 = vpack.c.bf16 %v542, %v541
      %v571 = vpack.c.bf16 %v544, %v543
      %v572 = vpack.c.bf16 %v546, %v545
      %v573 = vpack.c.bf16 %v548, %v547
      %v574 = vpack.c.bf16 %v550, %v549
      %v575 = vpack.c.bf16 %v552, %v551
      %v576 = vpack.c.bf16 %v554, %v553
      %v577 = vpack.c.bf16 %v556, %v555
      %v578 = vpack.c.bf16 %v558, %v557
      %v579 = vpack.c.bf16 %v560, %v559
      %v580 = vpack.c.bf16 %v562, %v561
      %v581 = vpack.c.bf16 %v564, %v563
      %v582 = vpack.c.bf16 %v566, %v565
      %v583 = vld [vmem:[%s3] sm:$0xf]
      %v584 = vld [vmem:[%s3 + $0x4] sm:$0xf]
      %v585 = vld [vmem:[%s3 + $0x8] sm:$0xf]
      %v586 = vld [vmem:[%s3 + $0xc] sm:$0xf]
      %v587 = vld [vmem:[%s3 + $0x10] sm:$0xf]
      %v588 = vld [vmem:[%s3 + $0x14] sm:$0xf]
      %v589 = vld [vmem:[%s3 + $0x18] sm:$0xf]
      %v590 = vld [vmem:[%s3 + $0x1c] sm:$0xf]
      %v591 = vld [vmem:[%s3 + $0x20] sm:$0xf]
      %v592 = vld [vmem:[%s3 + $0x24] sm:$0xf]
      %v593 = vld [vmem:[%s3 + $0x28] sm:$0xf]
      %v594 = vld [vmem:[%s3 + $0x2c] sm:$0xf]
      %v595 = vld [vmem:[%s3 + $0x30] sm:$0xf]
      %v596 = vld [vmem:[%s3 + $0x34] sm:$0xf]
      %v597 = vld [vmem:[%s3 + $0x38] sm:$0xf]
      %v598 = vld [vmem:[%s3 + $0x3c] sm:$0xf]
      %v599 = vld [vmem:[%s4] sm:$0x1]
      %v601 = vperm.slane %v599, 0
      %v619 = vunpack.c.l.b16 %v583
      %v620 = vunpack.c.l.b16 %v584
      %v621 = vunpack.c.l.b16 %v585
      %v622 = vunpack.c.l.b16 %v586
      %v623 = vunpack.c.l.b16 %v587
      %v624 = vunpack.c.l.b16 %v588
      %v625 = vunpack.c.l.b16 %v589
      %v626 = vunpack.c.l.b16 %v590
      %v627 = vunpack.c.l.b16 %v591
      %v628 = vunpack.c.l.b16 %v592
      %v629 = vunpack.c.l.b16 %v593
      %v630 = vunpack.c.l.b16 %v594
      %v631 = vunpack.c.l.b16 %v595
      %v632 = vunpack.c.l.b16 %v596
      %v633 = vunpack.c.l.b16 %v597
      %v634 = vunpack.c.l.b16 %v598
      %v635 = vpack.c.b16 %v620, %v619
      %v636 = vpack.c.b16 %v622, %v621
      %v637 = vpack.c.b16 %v624, %v623
      %v638 = vpack.c.b16 %v626, %v625
      %v639 = vpack.c.b16 %v628, %v627
      %v640 = vpack.c.b16 %v630, %v629
      %v641 = vpack.c.b16 %v632, %v631
      %v642 = vpack.c.b16 %v634, %v633
      %651 = vmatpush.bf16.msra.mxu0 %v642
      %652 = vmatpush.bf16.msra.mxu0 %v641
      %653 = vmatpush.bf16.msra.mxu0 %v640
      %654 = vmatpush.bf16.msra.mxu0 %v639
      %655 = vmatpush.bf16.msra.mxu0 %v638
      %656 = vmatpush.bf16.msra.mxu0 %v637
      %657 = vmatpush.bf16.msra.mxu0 %v636
      %658 = vmatpush.bf16.msra.mxu0 %v635
      %659 = vmatmul.bf16.gmra.mxu0 %v567
      %v660 = vpop.f32.mrf.mxu0
      %v661 = vadd.f32 %v601, %v660
      %v662 = vpop.f32.mrf.mxu0
      %v663 = vadd.f32 %v601, %v662
      %664 = vmatmul.bf16.gmra.mxu0 %v568
      %v665 = vpop.f32.mrf.mxu0
      %v666 = vadd.f32 %v601, %v665
      %v667 = vpop.f32.mrf.mxu0
      %v668 = vadd.f32 %v601, %v667
      %669 = vmatmul.bf16.gmra.mxu0 %v569
      %v670 = vpop.f32.mrf.mxu0
      %v671 = vadd.f32 %v601, %v670
      %v672 = vpop.f32.mrf.mxu0
      %v673 = vadd.f32 %v601, %v672
      %674 = vmatmul.bf16.gmra.mxu0 %v570
      %v675 = vpop.f32.mrf.mxu0
      %v676 = vadd.f32 %v601, %v675
      %v677 = vpop.f32.mrf.mxu0
      %v678 = vadd.f32 %v601, %v677
      %679 = vmatmul.bf16.gmra.mxu0 %v571
      %v680 = vpop.f32.mrf.mxu0
      %v681 = vadd.f32 %v601, %v680
      %v682 = vpop.f32.mrf.mxu0
      %v683 = vadd.f32 %v601, %v682
      %684 = vmatmul.bf16.gmra.mxu0 %v572
      %v685 = vpop.f32.mrf.mxu0
      %v686 = vadd.f32 %v601, %v685
      %v687 = vpop.f32.mrf.mxu0
      %v688 = vadd.f32 %v601, %v687
      %689 = vmatmul.bf16.gmra.mxu0 %v573
      %v690 = vpop.f32.mrf.mxu0
      %v691 = vadd.f32 %v601, %v690
      %v692 = vpop.f32.mrf.mxu0
      %v693 = vadd.f32 %v601, %v692
      %694 = vmatmul.bf16.gmra.mxu0 %v574
      %v695 = vpop.f32.mrf.mxu0
      %v696 = vadd.f32 %v601, %v695
      %v697 = vpop.f32.mrf.mxu0
      %v698 = vadd.f32 %v601, %v697
      %699 = vmatmul.bf16.gmra.mxu0 %v575
      %v700 = vpop.f32.mrf.mxu0
      %v701 = vadd.f32 %v601, %v700
      %v702 = vpop.f32.mrf.mxu0
      %v703 = vadd.f32 %v601, %v702
      %704 = vmatmul.bf16.gmra.mxu0 %v576
      %v705 = vpop.f32.mrf.mxu0
      %v706 = vadd.f32 %v601, %v705
      %v707 = vpop.f32.mrf.mxu0
      %v708 = vadd.f32 %v601, %v707
      %709 = vmatmul.bf16.gmra.mxu0 %v577
      %v710 = vpop.f32.mrf.mxu0
      %v711 = vadd.f32 %v601, %v710
      %v712 = vpop.f32.mrf.mxu0
      %v713 = vadd.f32 %v601, %v712
      %714 = vmatmul.bf16.gmra.mxu0 %v578
      %v715 = vpop.f32.mrf.mxu0
      %v716 = vadd.f32 %v601, %v715
      %v717 = vpop.f32.mrf.mxu0
      %v718 = vadd.f32 %v601, %v717
      %719 = vmatmul.bf16.gmra.mxu0 %v579
      %v720 = vpop.f32.mrf.mxu0
      %v721 = vadd.f32 %v601, %v720
      %v722 = vpop.f32.mrf.mxu0
      %v723 = vadd.f32 %v601, %v722
      %724 = vmatmul.bf16.gmra.mxu0 %v580
      %v725 = vpop.f32.mrf.mxu0
      %v726 = vadd.f32 %v601, %v725
      %v727 = vpop.f32.mrf.mxu0
      %v728 = vadd.f32 %v601, %v727
      %729 = vmatmul.bf16.gmra.mxu0 %v581
      %v730 = vpop.f32.mrf.mxu0
      %v731 = vadd.f32 %v601, %v730
      %v732 = vpop.f32.mrf.mxu0
      %v733 = vadd.f32 %v601, %v732
      %734 = vmatmul.bf16.gmra.mxu0 %v582
      %v735 = vpop.f32.mrf.mxu0
      %v736 = vadd.f32 %v601, %v735
      %v737 = vpop.f32.mrf.mxu0
      %v738 = vadd.f32 %v601, %v737
      %739 = vdwg.mxu0
      %v740 = vmax.f32 %v661, 0.0
      %v741 = vmax.f32 %v663, 0.0
      %v742 = vmax.f32 %v666, 0.0
      %v743 = vmax.f32 %v668, 0.0
      %v744 = vmax.f32 %v671, 0.0
      %v745 = vmax.f32 %v673, 0.0
      %v746 = vmax.f32 %v676, 0.0
      %v747 = vmax.f32 %v678, 0.0
      %v748 = vmax.f32 %v681, 0.0
      %v749 = vmax.f32 %v683, 0.0
      %v750 = vmax.f32 %v686, 0.0
      %v751 = vmax.f32 %v688, 0.0
      %v752 = vmax.f32 %v691, 0.0
      %v753 = vmax.f32 %v693, 0.0
      %v754 = vmax.f32 %v696, 0.0
      %v755 = vmax.f32 %v698, 0.0
      %v756 = vmax.f32 %v701, 0.0
      %v757 = vmax.f32 %v703, 0.0
      %v758 = vmax.f32 %v706, 0.0
      %v759 = vmax.f32 %v708, 0.0
      %v760 = vmax.f32 %v711, 0.0
      %v761 = vmax.f32 %v713, 0.0
      %v762 = vmax.f32 %v716, 0.0
      %v763 = vmax.f32 %v718, 0.0
      %v764 = vmax.f32 %v721, 0.0
      %v765 = vmax.f32 %v723, 0.0
      %v766 = vmax.f32 %v726, 0.0
      %v767 = vmax.f32 %v728, 0.0
      %v768 = vmax.f32 %v731, 0.0
      %v769 = vmax.f32 %v733, 0.0
      %v770 = vmax.f32 %v736, 0.0
      %v771 = vmax.f32 %v738, 0.0
      %v772 = vpack.c.bf16 %v741, %v740
      %v773 = vpack.c.bf16 %v743, %v742
      %v774 = vpack.c.bf16 %v745, %v744
      %v775 = vpack.c.bf16 %v747, %v746
      %v776 = vpack.c.bf16 %v749, %v748
      %v777 = vpack.c.bf16 %v751, %v750
      %v778 = vpack.c.bf16 %v753, %v752
      %v779 = vpack.c.bf16 %v755, %v754
      %v780 = vpack.c.bf16 %v757, %v756
      %v781 = vpack.c.bf16 %v759, %v758
      %v782 = vpack.c.bf16 %v761, %v760
      %v783 = vpack.c.bf16 %v763, %v762
      %v784 = vpack.c.bf16 %v765, %v764
      %v785 = vpack.c.bf16 %v767, %v766
      %v786 = vpack.c.bf16 %v769, %v768
      %v787 = vpack.c.bf16 %v771, %v770
      %v788 = vld [vmem:[%s5] sm:$0xf]
      %v789 = vld [vmem:[%s5 + $0x4] sm:$0xf]
      %v790 = vld [vmem:[%s5 + $0x8] sm:$0xf]
      %v791 = vld [vmem:[%s5 + $0xc] sm:$0xf]
      %v792 = vld [vmem:[%s5 + $0x10] sm:$0xf]
      %v793 = vld [vmem:[%s5 + $0x14] sm:$0xf]
      %v794 = vld [vmem:[%s5 + $0x18] sm:$0xf]
      %v795 = vld [vmem:[%s5 + $0x1c] sm:$0xf]
      %v796 = vld [vmem:[%s5 + $0x20] sm:$0xf]
      %v797 = vld [vmem:[%s5 + $0x24] sm:$0xf]
      %v798 = vld [vmem:[%s5 + $0x28] sm:$0xf]
      %v799 = vld [vmem:[%s5 + $0x2c] sm:$0xf]
      %v800 = vld [vmem:[%s5 + $0x30] sm:$0xf]
      %v801 = vld [vmem:[%s5 + $0x34] sm:$0xf]
      %v802 = vld [vmem:[%s5 + $0x38] sm:$0xf]
      %v803 = vld [vmem:[%s5 + $0x3c] sm:$0xf]
      %v804 = vld [vmem:[%s6] sm:$0x1]
      %v806 = vperm.slane %v804, 0
      %v824 = vunpack.c.l.b16 %v788
      %v825 = vunpack.c.l.b16 %v789
      %v826 = vunpack.c.l.b16 %v790
      %v827 = vunpack.c.l.b16 %v791
      %v828 = vunpack.c.l.b16 %v792
      %v829 = vunpack.c.l.b16 %v793
      %v830 = vunpack.c.l.b16 %v794
      %v831 = vunpack.c.l.b16 %v795
      %v832 = vunpack.c.l.b16 %v796
      %v833 = vunpack.c.l.b16 %v797
      %v834 = vunpack.c.l.b16 %v798
      %v835 = vunpack.c.l.b16 %v799
      %v836 = vunpack.c.l.b16 %v800
      %v837 = vunpack.c.l.b16 %v801
      %v838 = vunpack.c.l.b16 %v802
      %v839 = vunpack.c.l.b16 %v803
      %v840 = vpack.c.b16 %v825, %v824
      %v841 = vpack.c.b16 %v827, %v826
      %v842 = vpack.c.b16 %v829, %v828
      %v843 = vpack.c.b16 %v831, %v830
      %v844 = vpack.c.b16 %v833, %v832
      %v845 = vpack.c.b16 %v835, %v834
      %v846 = vpack.c.b16 %v837, %v836
      %v847 = vpack.c.b16 %v839, %v838
      %856 = vmatpush.bf16.msra.mxu0 %v847
      %857 = vmatpush.bf16.msra.mxu0 %v846
      %858 = vmatpush.bf16.msra.mxu0 %v845
      %859 = vmatpush.bf16.msra.mxu0 %v844
      %860 = vmatpush.bf16.msra.mxu0 %v843
      %861 = vmatpush.bf16.msra.mxu0 %v842
      %862 = vmatpush.bf16.msra.mxu0 %v841
      %863 = vmatpush.bf16.msra.mxu0 %v840
      %864 = vmatmul.bf16.gmra.mxu0 %v772
      %v865 = vpop.f32.mrf.mxu0
      %v866 = vadd.f32 %v806, %v865
      %v867 = vpop.f32.mrf.mxu0
      %v868 = vadd.f32 %v806, %v867
      %869 = vmatmul.bf16.gmra.mxu0 %v773
      %v870 = vpop.f32.mrf.mxu0
      %v871 = vadd.f32 %v806, %v870
      %v872 = vpop.f32.mrf.mxu0
      %v873 = vadd.f32 %v806, %v872
      %874 = vmatmul.bf16.gmra.mxu0 %v774
      %v875 = vpop.f32.mrf.mxu0
      %v876 = vadd.f32 %v806, %v875
      %v877 = vpop.f32.mrf.mxu0
      %v878 = vadd.f32 %v806, %v877
      %879 = vmatmul.bf16.gmra.mxu0 %v775
      %v880 = vpop.f32.mrf.mxu0
      %v881 = vadd.f32 %v806, %v880
      %v882 = vpop.f32.mrf.mxu0
      %v883 = vadd.f32 %v806, %v882
      %884 = vmatmul.bf16.gmra.mxu0 %v776
      %v885 = vpop.f32.mrf.mxu0
      %v886 = vadd.f32 %v806, %v885
      %v887 = vpop.f32.mrf.mxu0
      %v888 = vadd.f32 %v806, %v887
      %889 = vmatmul.bf16.gmra.mxu0 %v777
      %v890 = vpop.f32.mrf.mxu0
      %v891 = vadd.f32 %v806, %v890
      %v892 = vpop.f32.mrf.mxu0
      %v893 = vadd.f32 %v806, %v892
      %894 = vmatmul.bf16.gmra.mxu0 %v778
      %v895 = vpop.f32.mrf.mxu0
      %v896 = vadd.f32 %v806, %v895
      %v897 = vpop.f32.mrf.mxu0
      %v898 = vadd.f32 %v806, %v897
      %899 = vmatmul.bf16.gmra.mxu0 %v779
      %v900 = vpop.f32.mrf.mxu0
      %v901 = vadd.f32 %v806, %v900
      %v902 = vpop.f32.mrf.mxu0
      %v903 = vadd.f32 %v806, %v902
      %904 = vmatmul.bf16.gmra.mxu0 %v780
      %v905 = vpop.f32.mrf.mxu0
      %v906 = vadd.f32 %v806, %v905
      %v907 = vpop.f32.mrf.mxu0
      %v908 = vadd.f32 %v806, %v907
      %909 = vmatmul.bf16.gmra.mxu0 %v781
      %v910 = vpop.f32.mrf.mxu0
      %v911 = vadd.f32 %v806, %v910
      %v912 = vpop.f32.mrf.mxu0
      %v913 = vadd.f32 %v806, %v912
      %914 = vmatmul.bf16.gmra.mxu0 %v782
      %v915 = vpop.f32.mrf.mxu0
      %v916 = vadd.f32 %v806, %v915
      %v917 = vpop.f32.mrf.mxu0
      %v918 = vadd.f32 %v806, %v917
      %919 = vmatmul.bf16.gmra.mxu0 %v783
      %v920 = vpop.f32.mrf.mxu0
      %v921 = vadd.f32 %v806, %v920
      %v922 = vpop.f32.mrf.mxu0
      %v923 = vadd.f32 %v806, %v922
      %924 = vmatmul.bf16.gmra.mxu0 %v784
      %v925 = vpop.f32.mrf.mxu0
      %v926 = vadd.f32 %v806, %v925
      %v927 = vpop.f32.mrf.mxu0
      %v928 = vadd.f32 %v806, %v927
      %929 = vmatmul.bf16.gmra.mxu0 %v785
      %v930 = vpop.f32.mrf.mxu0
      %v931 = vadd.f32 %v806, %v930
      %v932 = vpop.f32.mrf.mxu0
      %v933 = vadd.f32 %v806, %v932
      %934 = vmatmul.bf16.gmra.mxu0 %v786
      %v935 = vpop.f32.mrf.mxu0
      %v936 = vadd.f32 %v806, %v935
      %v937 = vpop.f32.mrf.mxu0
      %v938 = vadd.f32 %v806, %v937
      %939 = vmatmul.bf16.gmra.mxu0 %v787
      %v940 = vpop.f32.mrf.mxu0
      %v941 = vadd.f32 %v806, %v940
      %v942 = vpop.f32.mrf.mxu0
      %v943 = vadd.f32 %v806, %v942
      %944 = vdwg.mxu0
      %v945 = vmax.f32 %v866, 0.0
      %v946 = vmax.f32 %v868, 0.0
      %v947 = vmax.f32 %v871, 0.0
      %v948 = vmax.f32 %v873, 0.0
      %v949 = vmax.f32 %v876, 0.0
      %v950 = vmax.f32 %v878, 0.0
      %v951 = vmax.f32 %v881, 0.0
      %v952 = vmax.f32 %v883, 0.0
      %v953 = vmax.f32 %v886, 0.0
      %v954 = vmax.f32 %v888, 0.0
      %v955 = vmax.f32 %v891, 0.0
      %v956 = vmax.f32 %v893, 0.0
      %v957 = vmax.f32 %v896, 0.0
      %v958 = vmax.f32 %v898, 0.0
      %v959 = vmax.f32 %v901, 0.0
      %v960 = vmax.f32 %v903, 0.0
      %v961 = vmax.f32 %v906, 0.0
      %v962 = vmax.f32 %v908, 0.0
      %v963 = vmax.f32 %v911, 0.0
      %v964 = vmax.f32 %v913, 0.0
      %v965 = vmax.f32 %v916, 0.0
      %v966 = vmax.f32 %v918, 0.0
      %v967 = vmax.f32 %v921, 0.0
      %v968 = vmax.f32 %v923, 0.0
      %v969 = vmax.f32 %v926, 0.0
      %v970 = vmax.f32 %v928, 0.0
      %v971 = vmax.f32 %v931, 0.0
      %v972 = vmax.f32 %v933, 0.0
      %v973 = vmax.f32 %v936, 0.0
      %v974 = vmax.f32 %v938, 0.0
      %v975 = vmax.f32 %v941, 0.0
      %v976 = vmax.f32 %v943, 0.0
      %v977 = vpack.c.bf16 %v946, %v945
      %v978 = vpack.c.bf16 %v948, %v947
      %v979 = vpack.c.bf16 %v950, %v949
      %v980 = vpack.c.bf16 %v952, %v951
      %v981 = vpack.c.bf16 %v954, %v953
      %v982 = vpack.c.bf16 %v956, %v955
      %v983 = vpack.c.bf16 %v958, %v957
      %v984 = vpack.c.bf16 %v960, %v959
      %v985 = vpack.c.bf16 %v962, %v961
      %v986 = vpack.c.bf16 %v964, %v963
      %v987 = vpack.c.bf16 %v966, %v965
      %v988 = vpack.c.bf16 %v968, %v967
      %v989 = vpack.c.bf16 %v970, %v969
      %v990 = vpack.c.bf16 %v972, %v971
      %v991 = vpack.c.bf16 %v974, %v973
      %v992 = vpack.c.bf16 %v976, %v975
      %v993 = vld [vmem:[%s7] sm:$0xf]
      %v994 = vld [vmem:[%s7 + $0x4] sm:$0xf]
      %v995 = vld [vmem:[%s7 + $0x8] sm:$0xf]
      %v996 = vld [vmem:[%s7 + $0xc] sm:$0xf]
      %v997 = vld [vmem:[%s7 + $0x10] sm:$0xf]
      %v998 = vld [vmem:[%s7 + $0x14] sm:$0xf]
      %v999 = vld [vmem:[%s7 + $0x18] sm:$0xf]
      %v1000 = vld [vmem:[%s7 + $0x1c] sm:$0xf]
      %v1001 = vld [vmem:[%s7 + $0x20] sm:$0xf]
      %v1002 = vld [vmem:[%s7 + $0x24] sm:$0xf]
      %v1003 = vld [vmem:[%s7 + $0x28] sm:$0xf]
      %v1004 = vld [vmem:[%s7 + $0x2c] sm:$0xf]
      %v1005 = vld [vmem:[%s7 + $0x30] sm:$0xf]
      %v1006 = vld [vmem:[%s7 + $0x34] sm:$0xf]
      %v1007 = vld [vmem:[%s7 + $0x38] sm:$0xf]
      %v1008 = vld [vmem:[%s7 + $0x3c] sm:$0xf]
      %v1009 = vld [vmem:[%s8] sm:$0x1]
      %v1011 = vperm.slane %v1009, 0
      %v1029 = vunpack.c.l.b16 %v993
      %v1030 = vunpack.c.l.b16 %v994
      %v1031 = vunpack.c.l.b16 %v995
      %v1032 = vunpack.c.l.b16 %v996
      %v1033 = vunpack.c.l.b16 %v997
      %v1034 = vunpack.c.l.b16 %v998
      %v1035 = vunpack.c.l.b16 %v999
      %v1036 = vunpack.c.l.b16 %v1000
      %v1037 = vunpack.c.l.b16 %v1001
      %v1038 = vunpack.c.l.b16 %v1002
      %v1039 = vunpack.c.l.b16 %v1003
      %v1040 = vunpack.c.l.b16 %v1004
      %v1041 = vunpack.c.l.b16 %v1005
      %v1042 = vunpack.c.l.b16 %v1006
      %v1043 = vunpack.c.l.b16 %v1007
      %v1044 = vunpack.c.l.b16 %v1008
      %v1045 = vpack.c.b16 %v1030, %v1029
      %v1046 = vpack.c.b16 %v1032, %v1031
      %v1047 = vpack.c.b16 %v1034, %v1033
      %v1048 = vpack.c.b16 %v1036, %v1035
      %v1049 = vpack.c.b16 %v1038, %v1037
      %v1050 = vpack.c.b16 %v1040, %v1039
      %v1051 = vpack.c.b16 %v1042, %v1041
      %v1052 = vpack.c.b16 %v1044, %v1043
      %1061 = vmatpush.bf16.msra.mxu0 %v1052
      %1062 = vmatpush.bf16.msra.mxu0 %v1051
      %1063 = vmatpush.bf16.msra.mxu0 %v1050
      %1064 = vmatpush.bf16.msra.mxu0 %v1049
      %1065 = vmatpush.bf16.msra.mxu0 %v1048
      %1066 = vmatpush.bf16.msra.mxu0 %v1047
      %1067 = vmatpush.bf16.msra.mxu0 %v1046
      %1068 = vmatpush.bf16.msra.mxu0 %v1045
      %1069 = vmatmul.bf16.gmra.mxu0 %v977
      %v1070 = vpop.f32.mrf.mxu0
      %v1071 = vadd.f32 %v1011, %v1070
      %v1072 = vpop.f32.mrf.mxu0
      %v1073 = vadd.f32 %v1011, %v1072
      %1074 = vmatmul.bf16.gmra.mxu0 %v978
      %v1075 = vpop.f32.mrf.mxu0
      %v1076 = vadd.f32 %v1011, %v1075
      %v1077 = vpop.f32.mrf.mxu0
      %v1078 = vadd.f32 %v1011, %v1077
      %1079 = vmatmul.bf16.gmra.mxu0 %v979
      %v1080 = vpop.f32.mrf.mxu0
      %v1081 = vadd.f32 %v1011, %v1080
      %v1082 = vpop.f32.mrf.mxu0
      %v1083 = vadd.f32 %v1011, %v1082
      %1084 = vmatmul.bf16.gmra.mxu0 %v980
      %v1085 = vpop.f32.mrf.mxu0
      %v1086 = vadd.f32 %v1011, %v1085
      %v1087 = vpop.f32.mrf.mxu0
      %v1088 = vadd.f32 %v1011, %v1087
      %1089 = vmatmul.bf16.gmra.mxu0 %v981
      %v1090 = vpop.f32.mrf.mxu0
      %v1091 = vadd.f32 %v1011, %v1090
      %v1092 = vpop.f32.mrf.mxu0
      %v1093 = vadd.f32 %v1011, %v1092
      %1094 = vmatmul.bf16.gmra.mxu0 %v982
      %v1095 = vpop.f32.mrf.mxu0
      %v1096 = vadd.f32 %v1011, %v1095
      %v1097 = vpop.f32.mrf.mxu0
      %v1098 = vadd.f32 %v1011, %v1097
      %1099 = vmatmul.bf16.gmra.mxu0 %v983
      %v1100 = vpop.f32.mrf.mxu0
      %v1101 = vadd.f32 %v1011, %v1100
      %v1102 = vpop.f32.mrf.mxu0
      %v1103 = vadd.f32 %v1011, %v1102
      %1104 = vmatmul.bf16.gmra.mxu0 %v984
      %v1105 = vpop.f32.mrf.mxu0
      %v1106 = vadd.f32 %v1011, %v1105
      %v1107 = vpop.f32.mrf.mxu0
      %v1108 = vadd.f32 %v1011, %v1107
      %1109 = vmatmul.bf16.gmra.mxu0 %v985
      %v1110 = vpop.f32.mrf.mxu0
      %v1111 = vadd.f32 %v1011, %v1110
      %v1112 = vpop.f32.mrf.mxu0
      %v1113 = vadd.f32 %v1011, %v1112
      %1114 = vmatmul.bf16.gmra.mxu0 %v986
      %v1115 = vpop.f32.mrf.mxu0
      %v1116 = vadd.f32 %v1011, %v1115
      %v1117 = vpop.f32.mrf.mxu0
      %v1118 = vadd.f32 %v1011, %v1117
      %1119 = vmatmul.bf16.gmra.mxu0 %v987
      %v1120 = vpop.f32.mrf.mxu0
      %v1121 = vadd.f32 %v1011, %v1120
      %v1122 = vpop.f32.mrf.mxu0
      %v1123 = vadd.f32 %v1011, %v1122
      %1124 = vmatmul.bf16.gmra.mxu0 %v988
      %v1125 = vpop.f32.mrf.mxu0
      %v1126 = vadd.f32 %v1011, %v1125
      %v1127 = vpop.f32.mrf.mxu0
      %v1128 = vadd.f32 %v1011, %v1127
      %1129 = vmatmul.bf16.gmra.mxu0 %v989
      %v1130 = vpop.f32.mrf.mxu0
      %v1131 = vadd.f32 %v1011, %v1130
      %v1132 = vpop.f32.mrf.mxu0
      %v1133 = vadd.f32 %v1011, %v1132
      %1134 = vmatmul.bf16.gmra.mxu0 %v990
      %v1135 = vpop.f32.mrf.mxu0
      %v1136 = vadd.f32 %v1011, %v1135
      %v1137 = vpop.f32.mrf.mxu0
      %v1138 = vadd.f32 %v1011, %v1137
      %1139 = vmatmul.bf16.gmra.mxu0 %v991
      %v1140 = vpop.f32.mrf.mxu0
      %v1141 = vadd.f32 %v1011, %v1140
      %v1142 = vpop.f32.mrf.mxu0
      %v1143 = vadd.f32 %v1011, %v1142
      %1144 = vmatmul.bf16.gmra.mxu0 %v992
      %v1145 = vpop.f32.mrf.mxu0
      %v1146 = vadd.f32 %v1011, %v1145
      %v1147 = vpop.f32.mrf.mxu0
      %v1148 = vadd.f32 %v1011, %v1147
      %1149 = vdwg.mxu0
      %1150 = vst [vmem:[%s334] sm:$0xff] %v1071
      %1151 = vst [vmem:[%s334 + $0x8] sm:$0xff] %v1073
      %1152 = vst [vmem:[%s334 + $0x10] sm:$0xff] %v1076
      %1153 = vst [vmem:[%s334 + $0x18] sm:$0xff] %v1078
      %1154 = vst [vmem:[%s334 + $0x20] sm:$0xff] %v1081
      %1155 = vst [vmem:[%s334 + $0x28] sm:$0xff] %v1083
      %1156 = vst [vmem:[%s334 + $0x30] sm:$0xff] %v1086
      %1157 = vst [vmem:[%s334 + $0x38] sm:$0xff] %v1088
      %1158 = vst [vmem:[%s334 + $0x40] sm:$0xff] %v1091
      %1159 = vst [vmem:[%s334 + $0x48] sm:$0xff] %v1093
      %1160 = vst [vmem:[%s334 + $0x50] sm:$0xff] %v1096
      %1161 = vst [vmem:[%s334 + $0x58] sm:$0xff] %v1098
      %1162 = vst [vmem:[%s334 + $0x60] sm:$0xff] %v1101
      %1163 = vst [vmem:[%s334 + $0x68] sm:$0xff] %v1103
      %1164 = vst [vmem:[%s334 + $0x70] sm:$0xff] %v1106
      %1165 = vst [vmem:[%s334 + $0x78] sm:$0xff] %v1108
      %1166 = vst [vmem:[%s334 + $0x80] sm:$0xff] %v1111
      %1167 = vst [vmem:[%s334 + $0x88] sm:$0xff] %v1113
      %1168 = vst [vmem:[%s334 + $0x90] sm:$0xff] %v1116
      %1169 = vst [vmem:[%s334 + $0x98] sm:$0xff] %v1118
      %1170 = vst [vmem:[%s334 + $0xa0] sm:$0xff] %v1121
      %1171 = vst [vmem:[%s334 + $0xa8] sm:$0xff] %v1123
      %1172 = vst [vmem:[%s334 + $0xb0] sm:$0xff] %v1126
      %1173 = vst [vmem:[%s334 + $0xb8] sm:$0xff] %v1128
      %1174 = vst [vmem:[%s334 + $0xc0] sm:$0xff] %v1131
      %1175 = vst [vmem:[%s334 + $0xc8] sm:$0xff] %v1133
      %1176 = vst [vmem:[%s334 + $0xd0] sm:$0xff] %v1136
      %1177 = vst [vmem:[%s334 + $0xd8] sm:$0xff] %v1138
      %1178 = vst [vmem:[%s334 + $0xe0] sm:$0xff] %v1141
      %1179 = vst [vmem:[%s334 + $0xe8] sm:$0xff] %v1143
      %1180 = vst [vmem:[%s334 + $0xf0] sm:$0xff] %v1146
      %1181 = vst [vmem:[%s334 + $0xf8] sm:$0xff] %v1148
      %s1182 = smul.u32 32, %s20
      %p1183 = scmp.lt.s32.totalorder %s1182, 63
      %s1184 = scalar_select %p1183, %s1182, 63
      %s1185 = smul.addr %s1184, 8
      %s1186 = scalar_lea.vmem %s9, %s1185
      // Predicated region
      $region57: #{_forward_impl.1} parent=55 // pred_check
        %p1187 = pneg %p232
      $region58: #{_forward_impl.1} parent=55 // pred_check_branch
        %1189 = sbr.rel (%p1187) target = $region60
      $region59: #{_forward_impl.1} parent=55 // pred_region
        %s1190 = smul.u32 32, %s20
      $region60: #{_forward_impl.1} parent=55 // pred_fallthru
        _
    $region56: #{_forward_impl.1} parent=5 // pred_fallthru
      _
    %p1191 = scmp.le.s32.totalorder 2, %s15
    // Predicated region
    $region61: #{_forward_impl.1} parent=5 // pred_check
      %p1192 = pneg %p1191
    $region62: #{_forward_impl.1} parent=5 // pred_check_branch
      %1194 = sbr.rel (%p1192) target = $region64
    $region63: #{_forward_impl.1} parent=5 // pred_region
      %s1195 = ssub.s32 %s15, 2
      // Predicated region
      $region65: #{_forward_impl.1} parent=63 // pred_check
        %p1196 = pneg %p238
      $region66: #{_forward_impl.1} parent=63 // pred_check_branch
        %1198 = sbr.rel (%p1196) target = $region68
      $region67: #{_forward_impl.1} parent=63 // pred_region
        %s1199 = smul.u32 32, %s21
        %p1200 = scmp.lt.s32.totalorder %s1199, 63
        %s1201 = scalar_select %p1200, %s1199, 63
        %s1202 = smul.addr %s1201, 8
        %s1203 = scalar_lea.vmem %s9, %s1202
      $region68: #{_forward_impl.1} parent=63 // pred_fallthru
        _
    $region64: #{_forward_impl.1} parent=5 // pred_fallthru
      _
  $region6: #{_forward_impl.1} parent=0 // loop_footer
    %s19 = sadd.s32 1, %s15
  $region7: #{_forward_impl.1} parent=0 // loop_footer_branch
    %14 = sbr.rel target = $region3
  $region8: #{_forward_impl.1} parent=0 // loop_exit
    _

// kernel: _forward_impl.1
$region0: #{_forward_impl.1}
  #allocation0 [shape = 'u32[]', space=smem, size = 0x4, offset = 0x4, fixed_abs, tag = 'smem constant byte address 0x4 - core index']
  #allocation1 [shape = 'u32[72,128]{1,0:T(1,128)}', space=vmem, size = 0x9000, scoped, tag = 'internal scratch']
  %s0 = inlined_call_operand.vmem [shape: f32[512,16], index: 0, kind: input, shape index: {}]
  %s1 = inlined_call_operand.vmem [shape: bf16[16,128], index: 1, kind: input, shape index: {}]
  %s2 = inlined_call_operand.vmem [shape: f32[1,128], index: 2, kind: input, shape index: {}]
  %s3 = inlined_call_operand.vmem [shape: bf16[128,128], index: 3, kind: input, shape index: {}]
  %s4 = inlined_call_operand.vmem [shape: f32[1,128], index: 4, kind: input, shape index: {}]
  %s5 = inlined_call_operand.vmem [shape: bf16[128,128], index: 5, kind: input, shape index: {}]
  %s6 = inlined_call_operand.vmem [shape: f32[1,128], index: 6, kind: input, shape index: {}]
  %s7 = inlined_call_operand.vmem [shape: bf16[128,128], index: 7, kind: input, shape index: {}]
  %s8 = inlined_call_operand.vmem [shape: f32[1,128], index: 8, kind: input, shape index: {}]
  %s9 = inlined_call_operand.vmem [shape: f32[512,128], index: 9, kind: output, shape index: {}]
  %s10 = sld [smem:[#allocation0]]
  $region69: #{_forward_impl.1} parent=0
    _
  %s12 = ssub.s32 1, %s10
  %s13 = scalar_select 0, %s12, %s10
  loop: start=0, step=1, limit=4
  $region2: #{_forward_impl.1} parent=0 // loop_pre_header
    _
  $region3: #{_forward_impl.1} parent=0 // loop_header
    %s15 = sphi 0, %s19
    %p16 = scmp.ge.s32.totalorder %s15, 4
    %s25 = sphi 0, %s27
    %s28 = sphi 0, %s25
    %s29 = sphi 0, %s28
    %s45 = sphi 0, %s29
    %s49 = sphi 0, %s49
    %s51 = sphi 0, %s49
    %s52 = sphi 0, %s51
    %s66 = sphi 0, %s52
    %s70 = sphi 0, %s70
    %s72 = sphi 0, %s70
    %s73 = sphi 0, %s72
    %s87 = sphi 0, %s73
    %s91 = sphi 0, %s91
    %s93 = sphi 0, %s91
    %s94 = sphi 0, %s93
    %s108 = sphi 0, %s94
    %s112 = sphi 0, %s112
    %s114 = sphi 0, %s112
    %s115 = sphi 0, %s114
    %s129 = sphi 0, %s115
    %s133 = sphi 0, %s133
    %s135 = sphi 0, %s133
    %s136 = sphi 0, %s135
    %s150 = sphi 0, %s136
    %s154 = sphi 0, %s154
    %s156 = sphi 0, %s154
    %s157 = sphi 0, %s156
    %s171 = sphi 0, %s157
    %s175 = sphi 0, %s175
    %s177 = sphi 0, %s175
    %s178 = sphi 0, %s177
    %s192 = sphi 0, %s178
    %s196 = sphi 0, %s196
    %s198 = sphi 0, %s196
    %s199 = sphi 0, %s198
    %s213 = sphi 0, %s199
    %s219 = sphi 0, %s221
    %s222 = sphi 0, %s219
    %s223 = sphi 0, %s222
    %s239 = sphi 0, %s223
  $region4: #{_forward_impl.1} parent=0 // loop_header_branch
    %18 = sbr.rel (%p16) target = $region8
  $region5: #{_forward_impl.1} parent=0 // loop_body
    %s20 = ssub.s32 %s15, 1
    %s21 = ssub.s32 %s15, 2
    %s22 = sadd.s32 %s15, 1
    %s23 = ssub.s32 %s15, %s22
    %p24 = scmp.eq.s32.totalorder %s23, 0
    %s26 = sadd.s32 %s25, 1
    %s27 = scalar_select %p24, %s25, %s26
    %p30 = pneg %p24
    %p31 = scmp.eq.s32.totalorder %s15, 1
    %p32 = por %p30, %p31
    %p33 = scmp.ne.s32.totalorder %s25, %s28
    %p34 = scmp.eq.s32.totalorder %s15, 0
    %p35 = por %p33, %p34
    %p36 = scmp.ne.s32.totalorder %s25, %s28
    %p37 = scmp.eq.s32.totalorder %s20, 1
    %p38 = por %p36, %p37
    %p39 = scmp.ne.s32.totalorder %s28, %s29
    %p40 = scmp.eq.s32.totalorder %s20, 0
    %p41 = por %p39, %p40
    %p42 = scmp.ne.s32.totalorder %s28, %s29
    %p43 = scmp.eq.s32.totalorder %s21, 1
    %p44 = por %p42, %p43
    %p46 = scmp.ne.s32.totalorder %s29, %s45
    %p47 = scmp.eq.s32.totalorder %s21, 0
    %p48 = por %p46, %p47
    %s50 = sadd.s32 %s49, 1
    %p53 = scmp.eq.s32.totalorder %s15, 1
    %p54 = scmp.ne.s32.totalorder %s49, %s51
    %p55 = scmp.eq.s32.totalorder %s15, 0
    %p56 = por %p54, %p55
    %p57 = scmp.ne.s32.totalorder %s49, %s51
    %p58 = scmp.eq.s32.totalorder %s20, 1
    %p59 = por %p57, %p58
    %p60 = scmp.ne.s32.totalorder %s51, %s52
    %p61 = scmp.eq.s32.totalorder %s20, 0
    %p62 = por %p60, %p61
    %p63 = scmp.ne.s32.totalorder %s51, %s52
    %p64 = scmp.eq.s32.totalorder %s21, 1
    %p65 = por %p63, %p64
    %p67 = scmp.ne.s32.totalorder %s52, %s66
    %p68 = scmp.eq.s32.totalorder %s21, 0
    %p69 = por %p67, %p68
    %s71 = sadd.s32 %s70, 1
    %p74 = scmp.eq.s32.totalorder %s15, 1
    %p75 = scmp.ne.s32.totalorder %s70, %s72
    %p76 = scmp.eq.s32.totalorder %s15, 0
    %p77 = por %p75, %p76
    %p78 = scmp.ne.s32.totalorder %s70, %s72
    %p79 = scmp.eq.s32.totalorder %s20, 1
    %p80 = por %p78, %p79
    %p81 = scmp.ne.s32.totalorder %s72, %s73
    %p82 = scmp.eq.s32.totalorder %s20, 0
    %p83 = por %p81, %p82
    %p84 = scmp.ne.s32.totalorder %s72, %s73
    %p85 = scmp.eq.s32.totalorder %s21, 1
    %p86 = por %p84, %p85
    %p88 = scmp.ne.s32.totalorder %s73, %s87
    %p89 = scmp.eq.s32.totalorder %s21, 0
    %p90 = por %p88, %p89
    %s92 = sadd.s32 %s91, 1
    %p95 = scmp.eq.s32.totalorder %s15, 1
    %p96 = scmp.ne.s32.totalorder %s91, %s93
    %p97 = scmp.eq.s32.totalorder %s15, 0
    %p98 = por %p96, %p97
    %p99 = scmp.ne.s32.totalorder %s91, %s93
    %p100 = scmp.eq.s32.totalorder %s20, 1
    %p101 = por %p99, %p100
    %p102 = scmp.ne.s32.totalorder %s93, %s94
    %p103 = scmp.eq.s32.totalorder %s20, 0
    %p104 = por %p102, %p103
    %p105 = scmp.ne.s32.totalorder %s93, %s94
    %p106 = scmp.eq.s32.totalorder %s21, 1
    %p107 = por %p105, %p106
    %p109 = scmp.ne.s32.totalorder %s94, %s108
    %p110 = scmp.eq.s32.totalorder %s21, 0
    %p111 = por %p109, %p110
    %s113 = sadd.s32 %s112, 1
    %p116 = scmp.eq.s32.totalorder %s15, 1
    %p117 = scmp.ne.s32.totalorder %s112, %s114
    %p118 = scmp.eq.s32.totalorder %s15, 0
    %p119 = por %p117, %p118
    %p120 = scmp.ne.s32.totalorder %s112, %s114
    %p121 = scmp.eq.s32.totalorder %s20, 1
    %p122 = por %p120, %p121
    %p123 = scmp.ne.s32.totalorder %s114, %s115
    %p124 = scmp.eq.s32.totalorder %s20, 0
    %p125 = por %p123, %p124
    %p126 = scmp.ne.s32.totalorder %s114, %s115
    %p127 = scmp.eq.s32.totalorder %s21, 1
    %p128 = por %p126, %p127
    %p130 = scmp.ne.s32.totalorder %s115, %s129
    %p131 = scmp.eq.s32.totalorder %s21, 0
    %p132 = por %p130, %p131
    %s134 = sadd.s32 %s133, 1
    %p137 = scmp.eq.s32.totalorder %s15, 1
    %p138 = scmp.ne.s32.totalorder %s133, %s135
    %p139 = scmp.eq.s32.totalorder %s15, 0
    %p140 = por %p138, %p139
    %p141 = scmp.ne.s32.totalorder %s133, %s135
    %p142 = scmp.eq.s32.totalorder %s20, 1
    %p143 = por %p141, %p142
    %p144 = scmp.ne.s32.totalorder %s135, %s136
    %p145 = scmp.eq.s32.totalorder %s20, 0
    %p146 = por %p144, %p145
    %p147 = scmp.ne.s32.totalorder %s135, %s136
    %p148 = scmp.eq.s32.totalorder %s21, 1
    %p149 = por %p147, %p148
    %p151 = scmp.ne.s32.totalorder %s136, %s150
    %p152 = scmp.eq.s32.totalorder %s21, 0
    %p153 = por %p151, %p152
    %s155 = sadd.s32 %s154, 1
    %p158 = scmp.eq.s32.totalorder %s15, 1
    %p159 = scmp.ne.s32.totalorder %s154, %s156
    %p160 = scmp.eq.s32.totalorder %s15, 0
    %p161 = por %p159, %p160
    %p162 = scmp.ne.s32.totalorder %s154, %s156
    %p163 = scmp.eq.s32.totalorder %s20, 1
    %p164 = por %p162, %p163
    %p165 = scmp.ne.s32.totalorder %s156, %s157
    %p166 = scmp.eq.s32.totalorder %s20, 0
    %p167 = por %p165, %p166
    %p168 = scmp.ne.s32.totalorder %s156, %s157
    %p169 = scmp.eq.s32.totalorder %s21, 1
    %p170 = por %p168, %p169
    %p172 = scmp.ne.s32.totalorder %s157, %s171
    %p173 = scmp.eq.s32.totalorder %s21, 0
    %p174 = por %p172, %p173
    %s176 = sadd.s32 %s175, 1
    %p179 = scmp.eq.s32.totalorder %s15, 1
    %p180 = scmp.ne.s32.totalorder %s175, %s177
    %p181 = scmp.eq.s32.totalorder %s15, 0
    %p182 = por %p180, %p181
    %p183 = scmp.ne.s32.totalorder %s175, %s177
    %p184 = scmp.eq.s32.totalorder %s20, 1
    %p185 = por %p183, %p184
    %p186 = scmp.ne.s32.totalorder %s177, %s178
    %p187 = scmp.eq.s32.totalorder %s20, 0
    %p188 = por %p186, %p187
    %p189 = scmp.ne.s32.totalorder %s177, %s178
    %p190 = scmp.eq.s32.totalorder %s21, 1
    %p191 = por %p189, %p190
    %p193 = scmp.ne.s32.totalorder %s178, %s192
    %p194 = scmp.eq.s32.totalorder %s21, 0
    %p195 = por %p193, %p194
    %s197 = sadd.s32 %s196, 1
    %p200 = scmp.eq.s32.totalorder %s15, 1
    %p201 = scmp.ne.s32.totalorder %s196, %s198
    %p202 = scmp.eq.s32.totalorder %s15, 0
    %p203 = por %p201, %p202
    %p204 = scmp.ne.s32.totalorder %s196, %s198
    %p205 = scmp.eq.s32.totalorder %s20, 1
    %p206 = por %p204, %p205
    %p207 = scmp.ne.s32.totalorder %s198, %s199
    %p208 = scmp.eq.s32.totalorder %s20, 0
    %p209 = por %p207, %p208
    %p210 = scmp.ne.s32.totalorder %s198, %s199
    %p211 = scmp.eq.s32.totalorder %s21, 1
    %p212 = por %p210, %p211
    %p214 = scmp.ne.s32.totalorder %s199, %s213
    %p215 = scmp.eq.s32.totalorder %s21, 0
    %p216 = por %p214, %p215
    %s217 = ssub.s32 %s15, %s22
    %p218 = scmp.eq.s32.totalorder %s217, 0
    %s220 = sadd.s32 %s219, 1
    %s221 = scalar_select %p218, %s219, %s220
    %p224 = pneg %p218
    %p225 = scmp.eq.s32.totalorder %s15, 1
    %p226 = por %p224, %p225
    %p227 = scmp.ne.s32.totalorder %s219, %s222
    %p228 = scmp.eq.s32.totalorder %s15, 0
    %p229 = por %p227, %p228
    %p230 = scmp.ne.s32.totalorder %s219, %s222
    %p231 = scmp.eq.s32.totalorder %s20, 1
    %p232 = por %p230, %p231
    %p233 = scmp.ne.s32.totalorder %s222, %s223
    %p234 = scmp.eq.s32.totalorder %s20, 0
    %p235 = por %p233, %p234
    %p236 = scmp.ne.s32.totalorder %s222, %s223
    %p237 = scmp.eq.s32.totalorder %s21, 1
    %p238 = por %p236, %p237
    %p240 = scmp.ne.s32.totalorder %s223, %s239
    %p241 = scmp.eq.s32.totalorder %s21, 0
    %p242 = por %p240, %p241
    %p243 = scmp.le.s32.totalorder 1, %s15
    %p244 = scmp.lt.s32.totalorder %s15, 3
    %p245 = pnand %p243, %p244
    %p246 = pneg %p245
    // Predicated region
    $region9: #{_forward_impl.1} parent=5 // pred_check
      _
    $region10: #{_forward_impl.1} parent=5 // pred_check_branch
      %248 = sbr.rel (%p245) target = $region12
    $region11: #{_forward_impl.1} parent=5 // pred_region
      %s249 = ssub.s32 %s15, 1
      // Predicated region
      $region13: #{_forward_impl.1} parent=11 // pred_check
        %p250 = pneg %p62
      $region14: #{_forward_impl.1} parent=11 // pred_check_branch
        %252 = sbr.rel (%p250) target = $region16
      $region15: #{_forward_impl.1} parent=11 // pred_region
        _
      $region16: #{_forward_impl.1} parent=11 // pred_fallthru
        _
      // Predicated region
      $region17: #{_forward_impl.1} parent=11 // pred_check
        %p253 = pneg %p83
      $region18: #{_forward_impl.1} parent=11 // pred_check_branch
        %255 = sbr.rel (%p253) target = $region20
      $region19: #{_forward_impl.1} parent=11 // pred_region
        _
      $region20: #{_forward_impl.1} parent=11 // pred_fallthru
        _
      // Predicated region
      $region21: #{_forward_impl.1} parent=11 // pred_check
        %p256 = pneg %p104
      $region22: #{_forward_impl.1} parent=11 // pred_check_branch
        %258 = sbr.rel (%p256) target = $region24
      $region23: #{_forward_impl.1} parent=11 // pred_region
        _
      $region24: #{_forward_impl.1} parent=11 // pred_fallthru
        _
      // Predicated region
      $region25: #{_forward_impl.1} parent=11 // pred_check
        %p259 = pneg %p125
      $region26: #{_forward_impl.1} parent=11 // pred_check_branch
        %261 = sbr.rel (%p259) target = $region28
      $region27: #{_forward_impl.1} parent=11 // pred_region
        _
      $region28: #{_forward_impl.1} parent=11 // pred_fallthru
        _
      // Predicated region
      $region29: #{_forward_impl.1} parent=11 // pred_check
        %p262 = pneg %p146
      $region30: #{_forward_impl.1} parent=11 // pred_check_branch
        %264 = sbr.rel (%p262) target = $region32
      $region31: #{_forward_impl.1} parent=11 // pred_region
        _
      $region32: #{_forward_impl.1} parent=11 // pred_fallthru
        _
      // Predicated region
      $region33: #{_forward_impl.1} parent=11 // pred_check
        %p265 = pneg %p167
      $region34: #{_forward_impl.1} parent=11 // pred_check_branch
        %267 = sbr.rel (%p265) target = $region36
      $region35: #{_forward_impl.1} parent=11 // pred_region
        _
      $region36: #{_forward_impl.1} parent=11 // pred_fallthru
        _
      // Predicated region
      $region37: #{_forward_impl.1} parent=11 // pred_check
        %p268 = pneg %p188
      $region38: #{_forward_impl.1} parent=11 // pred_check_branch
        %270 = sbr.rel (%p268) target = $region40
      $region39: #{_forward_impl.1} parent=11 // pred_region
        _
      $region40: #{_forward_impl.1} parent=11 // pred_fallthru
        _
      // Predicated region
      $region41: #{_forward_impl.1} parent=11 // pred_check
        %p271 = pneg %p209
      $region42: #{_forward_impl.1} parent=11 // pred_check_branch
        %273 = sbr.rel (%p271) target = $region44
      $region43: #{_forward_impl.1} parent=11 // pred_region
        _
      $region44: #{_forward_impl.1} parent=11 // pred_fallthru
        _
    $region12: #{_forward_impl.1} parent=5 // pred_fallthru
      _
    %p274 = scmp.lt.s32.totalorder %s15, 2
    // Predicated region
    $region45: #{_forward_impl.1} parent=5 // pred_check
      %p275 = pneg %p274
    $region46: #{_forward_impl.1} parent=5 // pred_check_branch
      %277 = sbr.rel (%p275) target = $region48
    $region47: #{_forward_impl.1} parent=5 // pred_region
      // Predicated region
      $region49: #{_forward_impl.1} parent=47 // pred_check
        %p278 = pneg %p35
      $region50: #{_forward_impl.1} parent=47 // pred_check_branch
        %280 = sbr.rel (%p278) target = $region52
      $region51: #{_forward_impl.1} parent=47 // pred_region
        %s281 = smul.u32 32, %s15
        %p282 = scmp.lt.s32.totalorder %s281, 63
        %s283 = scalar_select %p282, %s281, 63
        %s284 = smul.addr %s283, 8
        %s285 = scalar_lea.vmem %s0, %s284
        %s286 = smul.u32 32, %s15
      $region52: #{_forward_impl.1} parent=47 // pred_fallthru
        _
    $region48: #{_forward_impl.1} parent=5 // pred_fallthru
      _
    %p287 = scmp.le.s32.totalorder 1, %s15
    %p288 = scmp.lt.s32.totalorder %s15, 3
    %p289 = pnand %p287, %p288
    %p290 = pneg %p289
    // Predicated region
    $region53: #{_forward_impl.1} parent=5 // pred_check
      _
    $region54: #{_forward_impl.1} parent=5 // pred_check_branch
      %292 = sbr.rel (%p289) target = $region56
    $region55: #{_forward_impl.1} parent=5 // pred_region
      %s293 = ssub.s32 %s15, 1
      %s294 = smul.u32 32, %s20
      %p295 = scmp.lt.s32.totalorder %s294, 63
      %s296 = scalar_select %p295, %s294, 63
      %s297 = smul.addr %s296, 8
      %s298 = scalar_lea.vmem %s0, %s297
      %p299 = pneg %p41
      %p300 = pneg %p38
      %p301 = pneg %p62
      %p302 = pneg %p59
      %p303 = pneg %p83
      %p304 = pneg %p80
      %p305 = pneg %p104
      %p306 = pneg %p101
      %p307 = pneg %p125
      %p308 = pneg %p122
      %p309 = pneg %p146
      %p310 = pneg %p143
      %p311 = pneg %p167
      %p312 = pneg %p164
      %p313 = pneg %p188
      %p314 = pneg %p185
      %p315 = pneg %p209
      %p316 = pneg %p206
      %p317 = pneg %p235
      %p318 = pneg %p232
      %s319 = smul.u32 32, %s20
      %p320 = scmp.lt.s32.totalorder %s319, 63
      %s321 = scalar_select %p320, %s319, 63
      %s322 = smul.addr %s321, 8
      %s323 = scalar_lea.vmem %s9, %s322
      %s324 = smul.u32 32, %s20
      %p325 = scmp.lt.s32.totalorder %s324, 63
      %s326 = scalar_select %p325, %s324, 63
      %s327 = smul.addr %s326, 8
      %s328 = scalar_lea.vmem %s0, %s327
      %s329 = smul.u32 32, %s20
      %s330 = smul.u32 32, %s20
      %p331 = scmp.lt.s32.totalorder %s330, 63
      %s332 = scalar_select %p331, %s330, 63
      %s333 = smul.addr %s332, 8
      %s334 = scalar_lea.vmem %s9, %s333
      %s335 = smul.u32 32, %s20
      %v337 = vld [vmem:[%s328] sm:$0xff]
      %v338 = vld [vmem:[%s328 + $0x8] sm:$0xff]
      %v339 = vld [vmem:[%s328 + $0x10] sm:$0xff]
      %v340 = vld [vmem:[%s328 + $0x18] sm:$0xff]
      %v341 = vld [vmem:[%s328 + $0x20] sm:$0xff]
      %v342 = vld [vmem:[%s328 + $0x28] sm:$0xff]
      %v343 = vld [vmem:[%s328 + $0x30] sm:$0xff]
      %v344 = vld [vmem:[%s328 + $0x38] sm:$0xff]
      %v345 = vld [vmem:[%s328 + $0x40] sm:$0xff]
      %v346 = vld [vmem:[%s328 + $0x48] sm:$0xff]
      %v347 = vld [vmem:[%s328 + $0x50] sm:$0xff]
      %v348 = vld [vmem:[%s328 + $0x58] sm:$0xff]
      %v349 = vld [vmem:[%s328 + $0x60] sm:$0xff]
      %v350 = vld [vmem:[%s328 + $0x68] sm:$0xff]
      %v351 = vld [vmem:[%s328 + $0x70] sm:$0xff]
      %v352 = vld [vmem:[%s328 + $0x78] sm:$0xff]
      %v353 = vld [vmem:[%s328 + $0x80] sm:$0xff]
      %v354 = vld [vmem:[%s328 + $0x88] sm:$0xff]
      %v355 = vld [vmem:[%s328 + $0x90] sm:$0xff]
      %v356 = vld [vmem:[%s328 + $0x98] sm:$0xff]
      %v357 = vld [vmem:[%s328 + $0xa0] sm:$0xff]
      %v358 = vld [vmem:[%s328 + $0xa8] sm:$0xff]
      %v359 = vld [vmem:[%s328 + $0xb0] sm:$0xff]
      %v360 = vld [vmem:[%s328 + $0xb8] sm:$0xff]
      %v361 = vld [vmem:[%s328 + $0xc0] sm:$0xff]
      %v362 = vld [vmem:[%s328 + $0xc8] sm:$0xff]
      %v363 = vld [vmem:[%s328 + $0xd0] sm:$0xff]
      %v364 = vld [vmem:[%s328 + $0xd8] sm:$0xff]
      %v365 = vld [vmem:[%s328 + $0xe0] sm:$0xff]
      %v366 = vld [vmem:[%s328 + $0xe8] sm:$0xff]
      %v367 = vld [vmem:[%s328 + $0xf0] sm:$0xff]
      %v368 = vld [vmem:[%s328 + $0xf8] sm:$0xff]
      %v369 = vpack.c.bf16 %v338, %v337
      %v370 = vpack.c.bf16 %v340, %v339
      %v371 = vpack.c.bf16 %v342, %v341
      %v372 = vpack.c.bf16 %v344, %v343
      %v373 = vpack.c.bf16 %v346, %v345
      %v374 = vpack.c.bf16 %v348, %v347
      %v375 = vpack.c.bf16 %v350, %v349
      %v376 = vpack.c.bf16 %v352, %v351
      %v377 = vpack.c.bf16 %v354, %v353
      %v378 = vpack.c.bf16 %v356, %v355
      %v379 = vpack.c.bf16 %v358, %v357
      %v380 = vpack.c.bf16 %v360, %v359
      %v381 = vpack.c.bf16 %v362, %v361
      %v382 = vpack.c.bf16 %v364, %v363
      %v383 = vpack.c.bf16 %v366, %v365
      %v384 = vpack.c.bf16 %v368, %v367
      %v385 = vld [vmem:[%s1] sm:$0xf]
      %v386 = vld [vmem:[%s1 + $0x4] sm:$0xf]
      %v387 = vld [vmem:[%s2] sm:$0x1]
      %v389 = vperm.slane %v387, 0
      %v393 = vunpack.c.l.b16 %v385
      %v394 = vunpack.c.l.b16 %v386
      %v395 = vpack.c.b16 %v394, %v393
      %vm397 = vcmask 130048
      %v399 = vsel %vm397, %v369, 0
      %v402 = vsel %vm397, %v370, 0
      %v405 = vsel %vm397, %v371, 0
      %v408 = vsel %vm397, %v372, 0
      %v411 = vsel %vm397, %v373, 0
      %v414 = vsel %vm397, %v374, 0
      %v417 = vsel %vm397, %v375, 0
      %v420 = vsel %vm397, %v376, 0
      %v423 = vsel %vm397, %v377, 0
      %v426 = vsel %vm397, %v378, 0
      %v429 = vsel %vm397, %v379, 0
      %v432 = vsel %vm397, %v380, 0
      %v435 = vsel %vm397, %v381, 0
      %v438 = vsel %vm397, %v382, 0
      %v441 = vsel %vm397, %v383, 0
      %v444 = vsel %vm397, %v384, 0
      %446 = vmatpush.bf16.msra.mxu0 0
      %447 = vmatpush.bf16.msra.mxu0 0
      %448 = vmatpush.bf16.msra.mxu0 0
      %449 = vmatpush.bf16.msra.mxu0 0
      %450 = vmatpush.bf16.msra.mxu0 0
      %451 = vmatpush.bf16.msra.mxu0 0
      %452 = vmatpush.bf16.msra.mxu0 0
      %453 = vmatpush.bf16.msra.mxu0 %v395
      %454 = vmatmul.bf16.gmra.mxu0 %v399
      %v455 = vpop.f32.mrf.mxu0
      %v456 = vadd.f32 %v389, %v455
      %v457 = vpop.f32.mrf.mxu0
      %v458 = vadd.f32 %v389, %v457
      %459 = vmatmul.bf16.gmra.mxu0 %v402
      %v460 = vpop.f32.mrf.mxu0
      %v461 = vadd.f32 %v389, %v460
      %v462 = vpop.f32.mrf.mxu0
      %v463 = vadd.f32 %v389, %v462
      %464 = vmatmul.bf16.gmra.mxu0 %v405
      %v465 = vpop.f32.mrf.mxu0
      %v466 = vadd.f32 %v389, %v465
      %v467 = vpop.f32.mrf.mxu0
      %v468 = vadd.f32 %v389, %v467
      %469 = vmatmul.bf16.gmra.mxu0 %v408
      %v470 = vpop.f32.mrf.mxu0
      %v471 = vadd.f32 %v389, %v470
      %v472 = vpop.f32.mrf.mxu0
      %v473 = vadd.f32 %v389, %v472
      %474 = vmatmul.bf16.gmra.mxu0 %v411
      %v475 = vpop.f32.mrf.mxu0
      %v476 = vadd.f32 %v389, %v475
      %v477 = vpop.f32.mrf.mxu0
      %v478 = vadd.f32 %v389, %v477
      %479 = vmatmul.bf16.gmra.mxu0 %v414
      %v480 = vpop.f32.mrf.mxu0
      %v481 = vadd.f32 %v389, %v480
      %v482 = vpop.f32.mrf.mxu0
      %v483 = vadd.f32 %v389, %v482
      %484 = vmatmul.bf16.gmra.mxu0 %v417
      %v485 = vpop.f32.mrf.mxu0
      %v486 = vadd.f32 %v389, %v485
      %v487 = vpop.f32.mrf.mxu0
      %v488 = vadd.f32 %v389, %v487
      %489 = vmatmul.bf16.gmra.mxu0 %v420
      %v490 = vpop.f32.mrf.mxu0
      %v491 = vadd.f32 %v389, %v490
      %v492 = vpop.f32.mrf.mxu0
      %v493 = vadd.f32 %v389, %v492
      %494 = vmatmul.bf16.gmra.mxu0 %v423
      %v495 = vpop.f32.mrf.mxu0
      %v496 = vadd.f32 %v389, %v495
      %v497 = vpop.f32.mrf.mxu0
      %v498 = vadd.f32 %v389, %v497
      %499 = vmatmul.bf16.gmra.mxu0 %v426
      %v500 = vpop.f32.mrf.mxu0
      %v501 = vadd.f32 %v389, %v500
      %v502 = vpop.f32.mrf.mxu0
      %v503 = vadd.f32 %v389, %v502
      %504 = vmatmul.bf16.gmra.mxu0 %v429
      %v505 = vpop.f32.mrf.mxu0
      %v506 = vadd.f32 %v389, %v505
      %v507 = vpop.f32.mrf.mxu0
      %v508 = vadd.f32 %v389, %v507
      %509 = vmatmul.bf16.gmra.mxu0 %v432
      %v510 = vpop.f32.mrf.mxu0
      %v511 = vadd.f32 %v389, %v510
      %v512 = vpop.f32.mrf.mxu0
      %v513 = vadd.f32 %v389, %v512
      %514 = vmatmul.bf16.gmra.mxu0 %v435
      %v515 = vpop.f32.mrf.mxu0
      %v516 = vadd.f32 %v389, %v515
      %v517 = vpop.f32.mrf.mxu0
      %v518 = vadd.f32 %v389, %v517
      %519 = vmatmul.bf16.gmra.mxu0 %v438
      %v520 = vpop.f32.mrf.mxu0
      %v521 = vadd.f32 %v389, %v520
      %v522 = vpop.f32.mrf.mxu0
      %v523 = vadd.f32 %v389, %v522
      %524 = vmatmul.bf16.gmra.mxu0 %v441
      %v525 = vpop.f32.mrf.mxu0
      %v526 = vadd.f32 %v389, %v525
      %v527 = vpop.f32.mrf.mxu0
      %v528 = vadd.f32 %v389, %v527
      %529 = vmatmul.bf16.gmra.mxu0 %v444
      %v530 = vpop.f32.mrf.mxu0
      %v531 = vadd.f32 %v389, %v530
      %v532 = vpop.f32.mrf.mxu0
      %v533 = vadd.f32 %v389, %v532
      %534 = vdwg.mxu0
      %v535 = vmax.f32 %v456, 0.0
      %v536 = vmax.f32 %v458, 0.0
      %v537 = vmax.f32 %v461, 0.0
      %v538 = vmax.f32 %v463, 0.0
      %v539 = vmax.f32 %v466, 0.0
      %v540 = vmax.f32 %v468, 0.0
      %v541 = vmax.f32 %v471, 0.0
      %v542 = vmax.f32 %v473, 0.0
      %v543 = vmax.f32 %v476, 0.0
      %v544 = vmax.f32 %v478, 0.0
      %v545 = vmax.f32 %v481, 0.0
      %v546 = vmax.f32 %v483, 0.0
      %v547 = vmax.f32 %v486, 0.0
      %v548 = vmax.f32 %v488, 0.0
      %v549 = vmax.f32 %v491, 0.0
      %v550 = vmax.f32 %v493, 0.0
      %v551 = vmax.f32 %v496, 0.0
      %v552 = vmax.f32 %v498, 0.0
      %v553 = vmax.f32 %v501, 0.0
      %v554 = vmax.f32 %v503, 0.0
      %v555 = vmax.f32 %v506, 0.0
      %v556 = vmax.f32 %v508, 0.0
      %v557 = vmax.f32 %v511, 0.0
      %v558 = vmax.f32 %v513, 0.0
      %v559 = vmax.f32 %v516, 0.0
      %v560 = vmax.f32 %v518, 0.0
      %v561 = vmax.f32 %v521, 0.0
      %v562 = vmax.f32 %v523, 0.0
      %v563 = vmax.f32 %v526, 0.0
      %v564 = vmax.f32 %v528, 0.0
      %v565 = vmax.f32 %v531, 0.0
      %v566 = vmax.f32 %v533, 0.0
      %v567 = vpack.c.bf16 %v536, %v535
      %v568 = vpack.c.bf16 %v538, %v537
      %v569 = vpack.c.bf16 %v540, %v539
      %v570 = vpack.c.bf16 %v542, %v541
      %v571 = vpack.c.bf16 %v544, %v543
      %v572 = vpack.c.bf16 %v546, %v545
      %v573 = vpack.c.bf16 %v548, %v547
      %v574 = vpack.c.bf16 %v550, %v549
      %v575 = vpack.c.bf16 %v552, %v551
      %v576 = vpack.c.bf16 %v554, %v553
      %v577 = vpack.c.bf16 %v556, %v555
      %v578 = vpack.c.bf16 %v558, %v557
      %v579 = vpack.c.bf16 %v560, %v559
      %v580 = vpack.c.bf16 %v562, %v561
      %v581 = vpack.c.bf16 %v564, %v563
      %v582 = vpack.c.bf16 %v566, %v565
      %v583 = vld [vmem:[%s3] sm:$0xf]
      %v584 = vld [vmem:[%s3 + $0x4] sm:$0xf]
      %v585 = vld [vmem:[%s3 + $0x8] sm:$0xf]
      %v586 = vld [vmem:[%s3 + $0xc] sm:$0xf]
      %v587 = vld [vmem:[%s3 + $0x10] sm:$0xf]
      %v588 = vld [vmem:[%s3 + $0x14] sm:$0xf]
      %v589 = vld [vmem:[%s3 + $0x18] sm:$0xf]
      %v590 = vld [vmem:[%s3 + $0x1c] sm:$0xf]
      %v591 = vld [vmem:[%s3 + $0x20] sm:$0xf]
      %v592 = vld [vmem:[%s3 + $0x24] sm:$0xf]
      %v593 = vld [vmem:[%s3 + $0x28] sm:$0xf]
      %v594 = vld [vmem:[%s3 + $0x2c] sm:$0xf]
      %v595 = vld [vmem:[%s3 + $0x30] sm:$0xf]
      %v596 = vld [vmem:[%s3 + $0x34] sm:$0xf]
      %v597 = vld [vmem:[%s3 + $0x38] sm:$0xf]
      %v598 = vld [vmem:[%s3 + $0x3c] sm:$0xf]
      %v599 = vld [vmem:[%s4] sm:$0x1]
      %v601 = vperm.slane %v599, 0
      %v619 = vunpack.c.l.b16 %v583
      %v620 = vunpack.c.l.b16 %v584
      %v621 = vunpack.c.l.b16 %v585
      %v622 = vunpack.c.l.b16 %v586
      %v623 = vunpack.c.l.b16 %v587
      %v624 = vunpack.c.l.b16 %v588
      %v625 = vunpack.c.l.b16 %v589
      %v626 = vunpack.c.l.b16 %v590
      %v627 = vunpack.c.l.b16 %v591
      %v628 = vunpack.c.l.b16 %v592
      %v629 = vunpack.c.l.b16 %v593
      %v630 = vunpack.c.l.b16 %v594
      %v631 = vunpack.c.l.b16 %v595
      %v632 = vunpack.c.l.b16 %v596
      %v633 = vunpack.c.l.b16 %v597
      %v634 = vunpack.c.l.b16 %v598
      %v635 = vpack.c.b16 %v620, %v619
      %v636 = vpack.c.b16 %v622, %v621
      %v637 = vpack.c.b16 %v624, %v623
      %v638 = vpack.c.b16 %v626, %v625
      %v639 = vpack.c.b16 %v628, %v627
      %v640 = vpack.c.b16 %v630, %v629
      %v641 = vpack.c.b16 %v632, %v631
      %v642 = vpack.c.b16 %v634, %v633
      %651 = vmatpush.bf16.msra.mxu0 %v642
      %652 = vmatpush.bf16.msra.mxu0 %v641
      %653 = vmatpush.bf16.msra.mxu0 %v640
      %654 = vmatpush.bf16.msra.mxu0 %v639
      %655 = vmatpush.bf16.msra.mxu0 %v638
      %656 = vmatpush.bf16.msra.mxu0 %v637
      %657 = vmatpush.bf16.msra.mxu0 %v636
      %658 = vmatpush.bf16.msra.mxu0 %v635
      %659 = vmatmul.bf16.gmra.mxu0 %v567
      %v660 = vpop.f32.mrf.mxu0
      %v661 = vadd.f32 %v601, %v660
      %v662 = vpop.f32.mrf.mxu0
      %v663 = vadd.f32 %v601, %v662
      %664 = vmatmul.bf16.gmra.mxu0 %v568
      %v665 = vpop.f32.mrf.mxu0
      %v666 = vadd.f32 %v601, %v665
      %v667 = vpop.f32.mrf.mxu0
      %v668 = vadd.f32 %v601, %v667
      %669 = vmatmul.bf16.gmra.mxu0 %v569
      %v670 = vpop.f32.mrf.mxu0
      %v671 = vadd.f32 %v601, %v670
      %v672 = vpop.f32.mrf.mxu0
      %v673 = vadd.f32 %v601, %v672
      %674 = vmatmul.bf16.gmra.mxu0 %v570
      %v675 = vpop.f32.mrf.mxu0
      %v676 = vadd.f32 %v601, %v675
      %v677 = vpop.f32.mrf.mxu0
      %v678 = vadd.f32 %v601, %v677
      %679 = vmatmul.bf16.gmra.mxu0 %v571
      %v680 = vpop.f32.mrf.mxu0
      %v681 = vadd.f32 %v601, %v680
      %v682 = vpop.f32.mrf.mxu0
      %v683 = vadd.f32 %v601, %v682
      %684 = vmatmul.bf16.gmra.mxu0 %v572
      %v685 = vpop.f32.mrf.mxu0
      %v686 = vadd.f32 %v601, %v685
      %v687 = vpop.f32.mrf.mxu0
      %v688 = vadd.f32 %v601, %v687
      %689 = vmatmul.bf16.gmra.mxu0 %v573
      %v690 = vpop.f32.mrf.mxu0
      %v691 = vadd.f32 %v601, %v690
      %v692 = vpop.f32.mrf.mxu0
      %v693 = vadd.f32 %v601, %v692
      %694 = vmatmul.bf16.gmra.mxu0 %v574
      %v695 = vpop.f32.mrf.mxu0
      %v696 = vadd.f32 %v601, %v695
      %v697 = vpop.f32.mrf.mxu0
      %v698 = vadd.f32 %v601, %v697
      %699 = vmatmul.bf16.gmra.mxu0 %v575
      %v700 = vpop.f32.mrf.mxu0
      %v701 = vadd.f32 %v601, %v700
      %v702 = vpop.f32.mrf.mxu0
      %v703 = vadd.f32 %v601, %v702
      %704 = vmatmul.bf16.gmra.mxu0 %v576
      %v705 = vpop.f32.mrf.mxu0
      %v706 = vadd.f32 %v601, %v705
      %v707 = vpop.f32.mrf.mxu0
      %v708 = vadd.f32 %v601, %v707
      %709 = vmatmul.bf16.gmra.mxu0 %v577
      %v710 = vpop.f32.mrf.mxu0
      %v711 = vadd.f32 %v601, %v710
      %v712 = vpop.f32.mrf.mxu0
      %v713 = vadd.f32 %v601, %v712
      %714 = vmatmul.bf16.gmra.mxu0 %v578
      %v715 = vpop.f32.mrf.mxu0
      %v716 = vadd.f32 %v601, %v715
      %v717 = vpop.f32.mrf.mxu0
      %v718 = vadd.f32 %v601, %v717
      %719 = vmatmul.bf16.gmra.mxu0 %v579
      %v720 = vpop.f32.mrf.mxu0
      %v721 = vadd.f32 %v601, %v720
      %v722 = vpop.f32.mrf.mxu0
      %v723 = vadd.f32 %v601, %v722
      %724 = vmatmul.bf16.gmra.mxu0 %v580
      %v725 = vpop.f32.mrf.mxu0
      %v726 = vadd.f32 %v601, %v725
      %v727 = vpop.f32.mrf.mxu0
      %v728 = vadd.f32 %v601, %v727
      %729 = vmatmul.bf16.gmra.mxu0 %v581
      %v730 = vpop.f32.mrf.mxu0
      %v731 = vadd.f32 %v601, %v730
      %v732 = vpop.f32.mrf.mxu0
      %v733 = vadd.f32 %v601, %v732
      %734 = vmatmul.bf16.gmra.mxu0 %v582
      %v735 = vpop.f32.mrf.mxu0
      %v736 = vadd.f32 %v601, %v735
      %v737 = vpop.f32.mrf.mxu0
      %v738 = vadd.f32 %v601, %v737
      %739 = vdwg.mxu0
      %v740 = vmax.f32 %v661, 0.0
      %v741 = vmax.f32 %v663, 0.0
      %v742 = vmax.f32 %v666, 0.0
      %v743 = vmax.f32 %v668, 0.0
      %v744 = vmax.f32 %v671, 0.0
      %v745 = vmax.f32 %v673, 0.0
      %v746 = vmax.f32 %v676, 0.0
      %v747 = vmax.f32 %v678, 0.0
      %v748 = vmax.f32 %v681, 0.0
      %v749 = vmax.f32 %v683, 0.0
      %v750 = vmax.f32 %v686, 0.0
      %v751 = vmax.f32 %v688, 0.0
      %v752 = vmax.f32 %v691, 0.0
      %v753 = vmax.f32 %v693, 0.0
      %v754 = vmax.f32 %v696, 0.0
      %v755 = vmax.f32 %v698, 0.0
      %v756 = vmax.f32 %v701, 0.0
      %v757 = vmax.f32 %v703, 0.0
      %v758 = vmax.f32 %v706, 0.0
      %v759 = vmax.f32 %v708, 0.0
      %v760 = vmax.f32 %v711, 0.0
      %v761 = vmax.f32 %v713, 0.0
      %v762 = vmax.f32 %v716, 0.0
      %v763 = vmax.f32 %v718, 0.0
      %v764 = vmax.f32 %v721, 0.0
      %v765 = vmax.f32 %v723, 0.0
      %v766 = vmax.f32 %v726, 0.0
      %v767 = vmax.f32 %v728, 0.0
      %v768 = vmax.f32 %v731, 0.0
      %v769 = vmax.f32 %v733, 0.0
      %v770 = vmax.f32 %v736, 0.0
      %v771 = vmax.f32 %v738, 0.0
      %v772 = vpack.c.bf16 %v741, %v740
      %v773 = vpack.c.bf16 %v743, %v742
      %v774 = vpack.c.bf16 %v745, %v744
      %v775 = vpack.c.bf16 %v747, %v746
      %v776 = vpack.c.bf16 %v749, %v748
      %v777 = vpack.c.bf16 %v751, %v750
      %v778 = vpack.c.bf16 %v753, %v752
      %v779 = vpack.c.bf16 %v755, %v754
      %v780 = vpack.c.bf16 %v757, %v756
      %v781 = vpack.c.bf16 %v759, %v758
      %v782 = vpack.c.bf16 %v761, %v760
      %v783 = vpack.c.bf16 %v763, %v762
      %v784 = vpack.c.bf16 %v765, %v764
      %v785 = vpack.c.bf16 %v767, %v766
      %v786 = vpack.c.bf16 %v769, %v768
      %v787 = vpack.c.bf16 %v771, %v770
      %v788 = vld [vmem:[%s5] sm:$0xf]
      %v789 = vld [vmem:[%s5 + $0x4] sm:$0xf]
      %v790 = vld [vmem:[%s5 + $0x8] sm:$0xf]
      %v791 = vld [vmem:[%s5 + $0xc] sm:$0xf]
      %v792 = vld [vmem:[%s5 + $0x10] sm:$0xf]
      %v793 = vld [vmem:[%s5 + $0x14] sm:$0xf]
      %v794 = vld [vmem:[%s5 + $0x18] sm:$0xf]
      %v795 = vld [vmem:[%s5 + $0x1c] sm:$0xf]
      %v796 = vld [vmem:[%s5 + $0x20] sm:$0xf]
      %v797 = vld [vmem:[%s5 + $0x24] sm:$0xf]
      %v798 = vld [vmem:[%s5 + $0x28] sm:$0xf]
      %v799 = vld [vmem:[%s5 + $0x2c] sm:$0xf]
      %v800 = vld [vmem:[%s5 + $0x30] sm:$0xf]
      %v801 = vld [vmem:[%s5 + $0x34] sm:$0xf]
      %v802 = vld [vmem:[%s5 + $0x38] sm:$0xf]
      %v803 = vld [vmem:[%s5 + $0x3c] sm:$0xf]
      %v804 = vld [vmem:[%s6] sm:$0x1]
      %v806 = vperm.slane %v804, 0
      %v824 = vunpack.c.l.b16 %v788
      %v825 = vunpack.c.l.b16 %v789
      %v826 = vunpack.c.l.b16 %v790
      %v827 = vunpack.c.l.b16 %v791
      %v828 = vunpack.c.l.b16 %v792
      %v829 = vunpack.c.l.b16 %v793
      %v830 = vunpack.c.l.b16 %v794
      %v831 = vunpack.c.l.b16 %v795
      %v832 = vunpack.c.l.b16 %v796
      %v833 = vunpack.c.l.b16 %v797
      %v834 = vunpack.c.l.b16 %v798
      %v835 = vunpack.c.l.b16 %v799
      %v836 = vunpack.c.l.b16 %v800
      %v837 = vunpack.c.l.b16 %v801
      %v838 = vunpack.c.l.b16 %v802
      %v839 = vunpack.c.l.b16 %v803
      %v840 = vpack.c.b16 %v825, %v824
      %v841 = vpack.c.b16 %v827, %v826
      %v842 = vpack.c.b16 %v829, %v828
      %v843 = vpack.c.b16 %v831, %v830
      %v844 = vpack.c.b16 %v833, %v832
      %v845 = vpack.c.b16 %v835, %v834
      %v846 = vpack.c.b16 %v837, %v836
      %v847 = vpack.c.b16 %v839, %v838
      %856 = vmatpush.bf16.msra.mxu0 %v847
      %857 = vmatpush.bf16.msra.mxu0 %v846
      %858 = vmatpush.bf16.msra.mxu0 %v845
      %859 = vmatpush.bf16.msra.mxu0 %v844
      %860 = vmatpush.bf16.msra.mxu0 %v843
      %861 = vmatpush.bf16.msra.mxu0 %v842
      %862 = vmatpush.bf16.msra.mxu0 %v841
      %863 = vmatpush.bf16.msra.mxu0 %v840
      %864 = vmatmul.bf16.gmra.mxu0 %v772
      %v865 = vpop.f32.mrf.mxu0
      %v866 = vadd.f32 %v806, %v865
      %v867 = vpop.f32.mrf.mxu0
      %v868 = vadd.f32 %v806, %v867
      %869 = vmatmul.bf16.gmra.mxu0 %v773
      %v870 = vpop.f32.mrf.mxu0
      %v871 = vadd.f32 %v806, %v870
      %v872 = vpop.f32.mrf.mxu0
      %v873 = vadd.f32 %v806, %v872
      %874 = vmatmul.bf16.gmra.mxu0 %v774
      %v875 = vpop.f32.mrf.mxu0
      %v876 = vadd.f32 %v806, %v875
      %v877 = vpop.f32.mrf.mxu0
      %v878 = vadd.f32 %v806, %v877
      %879 = vmatmul.bf16.gmra.mxu0 %v775
      %v880 = vpop.f32.mrf.mxu0
      %v881 = vadd.f32 %v806, %v880
      %v882 = vpop.f32.mrf.mxu0
      %v883 = vadd.f32 %v806, %v882
      %884 = vmatmul.bf16.gmra.mxu0 %v776
      %v885 = vpop.f32.mrf.mxu0
      %v886 = vadd.f32 %v806, %v885
      %v887 = vpop.f32.mrf.mxu0
      %v888 = vadd.f32 %v806, %v887
      %889 = vmatmul.bf16.gmra.mxu0 %v777
      %v890 = vpop.f32.mrf.mxu0
      %v891 = vadd.f32 %v806, %v890
      %v892 = vpop.f32.mrf.mxu0
      %v893 = vadd.f32 %v806, %v892
      %894 = vmatmul.bf16.gmra.mxu0 %v778
      %v895 = vpop.f32.mrf.mxu0
      %v896 = vadd.f32 %v806, %v895
      %v897 = vpop.f32.mrf.mxu0
      %v898 = vadd.f32 %v806, %v897
      %899 = vmatmul.bf16.gmra.mxu0 %v779
      %v900 = vpop.f32.mrf.mxu0
      %v901 = vadd.f32 %v806, %v900
      %v902 = vpop.f32.mrf.mxu0
      %v903 = vadd.f32 %v806, %v902
      %904 = vmatmul.bf16.gmra.mxu0 %v780
      %v905 = vpop.f32.mrf.mxu0
      %v906 = vadd.f32 %v806, %v905
      %v907 = vpop.f32.mrf.mxu0
      %v908 = vadd.f32 %v806, %v907
      %909 = vmatmul.bf16.gmra.mxu0 %v781
      %v910 = vpop.f32.mrf.mxu0
      %v911 = vadd.f32 %v806, %v910
      %v912 = vpop.f32.mrf.mxu0
      %v913 = vadd.f32 %v806, %v912
      %914 = vmatmul.bf16.gmra.mxu0 %v782
      %v915 = vpop.f32.mrf.mxu0
      %v916 = vadd.f32 %v806, %v915
      %v917 = vpop.f32.mrf.mxu0
      %v918 = vadd.f32 %v806, %v917
      %919 = vmatmul.bf16.gmra.mxu0 %v783
      %v920 = vpop.f32.mrf.mxu0
      %v921 = vadd.f32 %v806, %v920
      %v922 = vpop.f32.mrf.mxu0
      %v923 = vadd.f32 %v806, %v922
      %924 = vmatmul.bf16.gmra.mxu0 %v784
      %v925 = vpop.f32.mrf.mxu0
      %v926 = vadd.f32 %v806, %v925
      %v927 = vpop.f32.mrf.mxu0
      %v928 = vadd.f32 %v806, %v927
      %929 = vmatmul.bf16.gmra.mxu0 %v785
      %v930 = vpop.f32.mrf.mxu0
      %v931 = vadd.f32 %v806, %v930
      %v932 = vpop.f32.mrf.mxu0
      %v933 = vadd.f32 %v806, %v932
      %934 = vmatmul.bf16.gmra.mxu0 %v786
      %v935 = vpop.f32.mrf.mxu0
      %v936 = vadd.f32 %v806, %v935
      %v937 = vpop.f32.mrf.mxu0
      %v938 = vadd.f32 %v806, %v937
      %939 = vmatmul.bf16.gmra.mxu0 %v787
      %v940 = vpop.f32.mrf.mxu0
      %v941 = vadd.f32 %v806, %v940
      %v942 = vpop.f32.mrf.mxu0
      %v943 = vadd.f32 %v806, %v942
      %944 = vdwg.mxu0
      %v945 = vmax.f32 %v866, 0.0
      %v946 = vmax.f32 %v868, 0.0
      %v947 = vmax.f32 %v871, 0.0
      %v948 = vmax.f32 %v873, 0.0
      %v949 = vmax.f32 %v876, 0.0
      %v950 = vmax.f32 %v878, 0.0
      %v951 = vmax.f32 %v881, 0.0
      %v952 = vmax.f32 %v883, 0.0
      %v953 = vmax.f32 %v886, 0.0
      %v954 = vmax.f32 %v888, 0.0
      %v955 = vmax.f32 %v891, 0.0
      %v956 = vmax.f32 %v893, 0.0
      %v957 = vmax.f32 %v896, 0.0
      %v958 = vmax.f32 %v898, 0.0
      %v959 = vmax.f32 %v901, 0.0
      %v960 = vmax.f32 %v903, 0.0
      %v961 = vmax.f32 %v906, 0.0
      %v962 = vmax.f32 %v908, 0.0
      %v963 = vmax.f32 %v911, 0.0
      %v964 = vmax.f32 %v913, 0.0
      %v965 = vmax.f32 %v916, 0.0
      %v966 = vmax.f32 %v918, 0.0
      %v967 = vmax.f32 %v921, 0.0
      %v968 = vmax.f32 %v923, 0.0
      %v969 = vmax.f32 %v926, 0.0
      %v970 = vmax.f32 %v928, 0.0
      %v971 = vmax.f32 %v931, 0.0
      %v972 = vmax.f32 %v933, 0.0
      %v973 = vmax.f32 %v936, 0.0
      %v974 = vmax.f32 %v938, 0.0
      %v975 = vmax.f32 %v941, 0.0
      %v976 = vmax.f32 %v943, 0.0
      %v977 = vpack.c.bf16 %v946, %v945
      %v978 = vpack.c.bf16 %v948, %v947
      %v979 = vpack.c.bf16 %v950, %v949
      %v980 = vpack.c.bf16 %v952, %v951
      %v981 = vpack.c.bf16 %v954, %v953
      %v982 = vpack.c.bf16 %v956, %v955
      %v983 = vpack.c.bf16 %v958, %v957
      %v984 = vpack.c.bf16 %v960, %v959
      %v985 = vpack.c.bf16 %v962, %v961
      %v986 = vpack.c.bf16 %v964, %v963
      %v987 = vpack.c.bf16 %v966, %v965
      %v988 = vpack.c.bf16 %v968, %v967
      %v989 = vpack.c.bf16 %v970, %v969
      %v990 = vpack.c.bf16 %v972, %v971
      %v991 = vpack.c.bf16 %v974, %v973
      %v992 = vpack.c.bf16 %v976, %v975
      %v993 = vld [vmem:[%s7] sm:$0xf]
      %v994 = vld [vmem:[%s7 + $0x4] sm:$0xf]
      %v995 = vld [vmem:[%s7 + $0x8] sm:$0xf]
      %v996 = vld [vmem:[%s7 + $0xc] sm:$0xf]
      %v997 = vld [vmem:[%s7 + $0x10] sm:$0xf]
      %v998 = vld [vmem:[%s7 + $0x14] sm:$0xf]
      %v999 = vld [vmem:[%s7 + $0x18] sm:$0xf]
      %v1000 = vld [vmem:[%s7 + $0x1c] sm:$0xf]
      %v1001 = vld [vmem:[%s7 + $0x20] sm:$0xf]
      %v1002 = vld [vmem:[%s7 + $0x24] sm:$0xf]
      %v1003 = vld [vmem:[%s7 + $0x28] sm:$0xf]
      %v1004 = vld [vmem:[%s7 + $0x2c] sm:$0xf]
      %v1005 = vld [vmem:[%s7 + $0x30] sm:$0xf]
      %v1006 = vld [vmem:[%s7 + $0x34] sm:$0xf]
      %v1007 = vld [vmem:[%s7 + $0x38] sm:$0xf]
      %v1008 = vld [vmem:[%s7 + $0x3c] sm:$0xf]
      %v1009 = vld [vmem:[%s8] sm:$0x1]
      %v1011 = vperm.slane %v1009, 0
      %v1029 = vunpack.c.l.b16 %v993
      %v1030 = vunpack.c.l.b16 %v994
      %v1031 = vunpack.c.l.b16 %v995
      %v1032 = vunpack.c.l.b16 %v996
      %v1033 = vunpack.c.l.b16 %v997
      %v1034 = vunpack.c.l.b16 %v998
      %v1035 = vunpack.c.l.b16 %v999
      %v1036 = vunpack.c.l.b16 %v1000
      %v1037 = vunpack.c.l.b16 %v1001
      %v1038 = vunpack.c.l.b16 %v1002
      %v1039 = vunpack.c.l.b16 %v1003
      %v1040 = vunpack.c.l.b16 %v1004
      %v1041 = vunpack.c.l.b16 %v1005
      %v1042 = vunpack.c.l.b16 %v1006
      %v1043 = vunpack.c.l.b16 %v1007
      %v1044 = vunpack.c.l.b16 %v1008
      %v1045 = vpack.c.b16 %v1030, %v1029
      %v1046 = vpack.c.b16 %v1032, %v1031
      %v1047 = vpack.c.b16 %v1034, %v1033
      %v1048 = vpack.c.b16 %v1036, %v1035
      %v1049 = vpack.c.b16 %v1038, %v1037
      %v1050 = vpack.c.b16 %v1040, %v1039
      %v1051 = vpack.c.b16 %v1042, %v1041
      %v1052 = vpack.c.b16 %v1044, %v1043
      %1061 = vmatpush.bf16.msra.mxu0 %v1052
      %1062 = vmatpush.bf16.msra.mxu0 %v1051
      %1063 = vmatpush.bf16.msra.mxu0 %v1050
      %1064 = vmatpush.bf16.msra.mxu0 %v1049
      %1065 = vmatpush.bf16.msra.mxu0 %v1048
      %1066 = vmatpush.bf16.msra.mxu0 %v1047
      %1067 = vmatpush.bf16.msra.mxu0 %v1046
      %1068 = vmatpush.bf16.msra.mxu0 %v1045
      %1069 = vmatmul.bf16.gmra.mxu0 %v977
      %v1070 = vpop.f32.mrf.mxu0
      %v1071 = vadd.f32 %v1011, %v1070
      %v1072 = vpop.f32.mrf.mxu0
      %v1073 = vadd.f32 %v1011, %v1072
      %1074 = vmatmul.bf16.gmra.mxu0 %v978
      %v1075 = vpop.f32.mrf.mxu0
      %v1076 = vadd.f32 %v1011, %v1075
      %v1077 = vpop.f32.mrf.mxu0
      %v1078 = vadd.f32 %v1011, %v1077
      %1079 = vmatmul.bf16.gmra.mxu0 %v979
      %v1080 = vpop.f32.mrf.mxu0
      %v1081 = vadd.f32 %v1011, %v1080
      %v1082 = vpop.f32.mrf.mxu0
      %v1083 = vadd.f32 %v1011, %v1082
      %1084 = vmatmul.bf16.gmra.mxu0 %v980
      %v1085 = vpop.f32.mrf.mxu0
      %v1086 = vadd.f32 %v1011, %v1085
      %v1087 = vpop.f32.mrf.mxu0
      %v1088 = vadd.f32 %v1011, %v1087
      %1089 = vmatmul.bf16.gmra.mxu0 %v981
      %v1090 = vpop.f32.mrf.mxu0
      %v1091 = vadd.f32 %v1011, %v1090
      %v1092 = vpop.f32.mrf.mxu0
      %v1093 = vadd.f32 %v1011, %v1092
      %1094 = vmatmul.bf16.gmra.mxu0 %v982
      %v1095 = vpop.f32.mrf.mxu0
      %v1096 = vadd.f32 %v1011, %v1095
      %v1097 = vpop.f32.mrf.mxu0
      %v1098 = vadd.f32 %v1011, %v1097
      %1099 = vmatmul.bf16.gmra.mxu0 %v983
      %v1100 = vpop.f32.mrf.mxu0
      %v1101 = vadd.f32 %v1011, %v1100
      %v1102 = vpop.f32.mrf.mxu0
      %v1103 = vadd.f32 %v1011, %v1102
      %1104 = vmatmul.bf16.gmra.mxu0 %v984
      %v1105 = vpop.f32.mrf.mxu0
      %v1106 = vadd.f32 %v1011, %v1105
      %v1107 = vpop.f32.mrf.mxu0
      %v1108 = vadd.f32 %v1011, %v1107
      %1109 = vmatmul.bf16.gmra.mxu0 %v985
      %v1110 = vpop.f32.mrf.mxu0
      %v1111 = vadd.f32 %v1011, %v1110
      %v1112 = vpop.f32.mrf.mxu0
      %v1113 = vadd.f32 %v1011, %v1112
      %1114 = vmatmul.bf16.gmra.mxu0 %v986
      %v1115 = vpop.f32.mrf.mxu0
      %v1116 = vadd.f32 %v1011, %v1115
      %v1117 = vpop.f32.mrf.mxu0
      %v1118 = vadd.f32 %v1011, %v1117
      %1119 = vmatmul.bf16.gmra.mxu0 %v987
      %v1120 = vpop.f32.mrf.mxu0
      %v1121 = vadd.f32 %v1011, %v1120
      %v1122 = vpop.f32.mrf.mxu0
      %v1123 = vadd.f32 %v1011, %v1122
      %1124 = vmatmul.bf16.gmra.mxu0 %v988
      %v1125 = vpop.f32.mrf.mxu0
      %v1126 = vadd.f32 %v1011, %v1125
      %v1127 = vpop.f32.mrf.mxu0
      %v1128 = vadd.f32 %v1011, %v1127
      %1129 = vmatmul.bf16.gmra.mxu0 %v989
      %v1130 = vpop.f32.mrf.mxu0
      %v1131 = vadd.f32 %v1011, %v1130
      %v1132 = vpop.f32.mrf.mxu0
      %v1133 = vadd.f32 %v1011, %v1132
      %1134 = vmatmul.bf16.gmra.mxu0 %v990
      %v1135 = vpop.f32.mrf.mxu0
      %v1136 = vadd.f32 %v1011, %v1135
      %v1137 = vpop.f32.mrf.mxu0
      %v1138 = vadd.f32 %v1011, %v1137
      %1139 = vmatmul.bf16.gmra.mxu0 %v991
      %v1140 = vpop.f32.mrf.mxu0
      %v1141 = vadd.f32 %v1011, %v1140
      %v1142 = vpop.f32.mrf.mxu0
      %v1143 = vadd.f32 %v1011, %v1142
      %1144 = vmatmul.bf16.gmra.mxu0 %v992
      %v1145 = vpop.f32.mrf.mxu0
      %v1146 = vadd.f32 %v1011, %v1145
      %v1147 = vpop.f32.mrf.mxu0
      %v1148 = vadd.f32 %v1011, %v1147
      %1149 = vdwg.mxu0
      %1150 = vst [vmem:[%s334] sm:$0xff] %v1071
      %1151 = vst [vmem:[%s334 + $0x8] sm:$0xff] %v1073
      %1152 = vst [vmem:[%s334 + $0x10] sm:$0xff] %v1076
      %1153 = vst [vmem:[%s334 + $0x18] sm:$0xff] %v1078
      %1154 = vst [vmem:[%s334 + $0x20] sm:$0xff] %v1081
      %1155 = vst [vmem:[%s334 + $0x28] sm:$0xff] %v1083
      %1156 = vst [vmem:[%s334 + $0x30] sm:$0xff] %v1086
      %1157 = vst [vmem:[%s334 + $0x38] sm:$0xff] %v1088
      %1158 = vst [vmem:[%s334 + $0x40] sm:$0xff] %v1091
      %1159 = vst [vmem:[%s334 + $0x48] sm:$0xff] %v1093
      %1160 = vst [vmem:[%s334 + $0x50] sm:$0xff] %v1096
      %1161 = vst [vmem:[%s334 + $0x58] sm:$0xff] %v1098
      %1162 = vst [vmem:[%s334 + $0x60] sm:$0xff] %v1101
      %1163 = vst [vmem:[%s334 + $0x68] sm:$0xff] %v1103
      %1164 = vst [vmem:[%s334 + $0x70] sm:$0xff] %v1106
      %1165 = vst [vmem:[%s334 + $0x78] sm:$0xff] %v1108
      %1166 = vst [vmem:[%s334 + $0x80] sm:$0xff] %v1111
      %1167 = vst [vmem:[%s334 + $0x88] sm:$0xff] %v1113
      %1168 = vst [vmem:[%s334 + $0x90] sm:$0xff] %v1116
      %1169 = vst [vmem:[%s334 + $0x98] sm:$0xff] %v1118
      %1170 = vst [vmem:[%s334 + $0xa0] sm:$0xff] %v1121
      %1171 = vst [vmem:[%s334 + $0xa8] sm:$0xff] %v1123
      %1172 = vst [vmem:[%s334 + $0xb0] sm:$0xff] %v1126
      %1173 = vst [vmem:[%s334 + $0xb8] sm:$0xff] %v1128
      %1174 = vst [vmem:[%s334 + $0xc0] sm:$0xff] %v1131
      %1175 = vst [vmem:[%s334 + $0xc8] sm:$0xff] %v1133
      %1176 = vst [vmem:[%s334 + $0xd0] sm:$0xff] %v1136
      %1177 = vst [vmem:[%s334 + $0xd8] sm:$0xff] %v1138
      %1178 = vst [vmem:[%s334 + $0xe0] sm:$0xff] %v1141
      %1179 = vst [vmem:[%s334 + $0xe8] sm:$0xff] %v1143
      %1180 = vst [vmem:[%s334 + $0xf0] sm:$0xff] %v1146
      %1181 = vst [vmem:[%s334 + $0xf8] sm:$0xff] %v1148
      %s1182 = smul.u32 32, %s20
      %p1183 = scmp.lt.s32.totalorder %s1182, 63
      %s1184 = scalar_select %p1183, %s1182, 63
      %s1185 = smul.addr %s1184, 8
      %s1186 = scalar_lea.vmem %s9, %s1185
      // Predicated region
      $region57: #{_forward_impl.1} parent=55 // pred_check
        %p1187 = pneg %p232
      $region58: #{_forward_impl.1} parent=55 // pred_check_branch
        %1189 = sbr.rel (%p1187) target = $region60
      $region59: #{_forward_impl.1} parent=55 // pred_region
        %s1190 = smul.u32 32, %s20
      $region60: #{_forward_impl.1} parent=55 // pred_fallthru
        _
    $region56: #{_forward_impl.1} parent=5 // pred_fallthru
      _
    %p1191 = scmp.le.s32.totalorder 2, %s15
    // Predicated region
    $region61: #{_forward_impl.1} parent=5 // pred_check
      %p1192 = pneg %p1191
    $region62: #{_forward_impl.1} parent=5 // pred_check_branch
      %1194 = sbr.rel (%p1192) target = $region64
    $region63: #{_forward_impl.1} parent=5 // pred_region
      %s1195 = ssub.s32 %s15, 2
      // Predicated region
      $region65: #{_forward_impl.1} parent=63 // pred_check
        %p1196 = pneg %p238
      $region66: #{_forward_impl.1} parent=63 // pred_check_branch
        %1198 = sbr.rel (%p1196) target = $region68
      $region67: #{_forward_impl.1} parent=63 // pred_region
        %s1199 = smul.u32 32, %s21
        %p1200 = scmp.lt.s32.totalorder %s1199, 63
        %s1201 = scalar_select %p1200, %s1199, 63
        %s1202 = smul.addr %s1201, 8
        %s1203 = scalar_lea.vmem %s9, %s1202
      $region68: #{_forward_impl.1} parent=63 // pred_fallthru
        _
    $region64: #{_forward_impl.1} parent=5 // pred_fallthru
      _
  $region6: #{_forward_impl.1} parent=0 // loop_footer
    %s19 = sadd.s32 1, %s15
  $region7: #{_forward_impl.1} parent=0 // loop_footer_branch
    %14 = sbr.rel target = $region3
  $region8: #{_forward_impl.1} parent=0 // loop_exit
    _

</llo_original>
